<compile_context>
chip_gen: v5e
topology: v5e:2x2
jax: 0.10.0
libtpu: 0.0.40
codegen_flags: <defaults>
</compile_context>

<pallas_src>
import functools

import jax
import jax.numpy as jnp
from jax.experimental import pallas as pl
from jax.experimental.pallas import tpu as pltpu


def _flash_mha_kernel(x_ref, wqkv_ref, bqkv_ref, wdw_ref, bdw_ref,
                      cos_ref, sin_ref, wout_ref, bout_ref, o_ref,
                      *, n_head, head_dim):
    TB, S, E = x_ref.shape
    H, D = n_head, head_dim
    Dh = D // 2
    C3 = 3 * E

    # ---- 1) QKV projection: bf16 operands on the MXU, f32 accumulation. ----
    x2 = x_ref[...].reshape(TB * S, E).astype(jnp.bfloat16)
    qkv2 = jnp.dot(x2, wqkv_ref[...],
                   preferred_element_type=jnp.float32) + bqkv_ref[...]       # (TB*S, 3E) f32
    qkv = qkv2.reshape(TB, S, C3)

    # ---- 2) Depthwise causal Conv1d(kernel=3, padding=2)[..., :-2] along seq. ----
    # out[t] = w0*in[t-2] + w1*in[t-1] + w2*in[t] + b (zero padding before t=0).
    # Temporal shifts are done in-layout (slice along the seq/sublane axis + zero rows),
    # NOT via rows x rows shift matmuls.
    wdw = wdw_ref[...]                                                        # (3, 3E)
    z1 = jnp.zeros((TB, 1, C3), jnp.float32)
    z2 = jnp.zeros((TB, 2, C3), jnp.float32)
    qkv_m1 = jnp.concatenate([z1, qkv[:, :S - 1, :]], axis=1)                 # in[t-1]
    qkv_m2 = jnp.concatenate([z2, qkv[:, :S - 2, :]], axis=1)                 # in[t-2]
    qkv = (qkv * wdw[2:3, :] + qkv_m1 * wdw[1:2, :] + qkv_m2 * wdw[0:1, :]
           + bdw_ref[...])

    # ---- 3+4) Per-head RoPE + scaled dot-product attention (non-causal, eval). ----
    # rotate_half via lane slices (no permutation matmul); cos/sin are a single
    # (S, D/2) table broadcast over batch and heads.
    cos = cos_ref[...]                                                        # (S, D/2)
    sin = sin_ref[...]
    scale = 1.0 / (D ** 0.5)

    def rope(u):                                   # u: (TB, S, D)
        u1 = u[..., :Dh]
        u2 = u[..., Dh:]
        return jnp.concatenate([u1 * cos - u2 * sin, u2 * cos + u1 * sin], axis=-1)

    # TODO(synk): attention dropout (training mode) would need pltpu PRNG masking.
    ctx_heads = []
    for h in range(H):                             # H is small & static: unrolled
        q_h = (rope(qkv[..., h * D:(h + 1) * D]) * scale).astype(jnp.bfloat16)
        k_h = rope(qkv[..., E + h * D:E + (h + 1) * D]).astype(jnp.bfloat16)
        v_h = qkv[..., 2 * E + h * D:2 * E + (h + 1) * D].astype(jnp.bfloat16)
        s = jnp.einsum('bqd,bkd->bqk', q_h, k_h,
                       preferred_element_type=jnp.float32)                   # scale folded in q
        m = jnp.max(s, axis=-1, keepdims=True)
        p = jnp.exp(s - m)
        l = jnp.sum(p, axis=-1, keepdims=True)
        ctx = jnp.einsum('bqk,bkd->bqd', p.astype(jnp.bfloat16), v_h,
                         preferred_element_type=jnp.float32)
        ctx_heads.append(ctx * pl.reciprocal(l, approx=True))                # normalize after PV
    ctx = jnp.concatenate(ctx_heads, axis=-1)                                # (TB, S, E)

    # ---- 5) Output projection (bf16 matmul, f32 accumulate + f32 bias). ----
    out = jnp.dot(ctx.reshape(TB * S, E).astype(jnp.bfloat16), wout_ref[...],
                  preferred_element_type=jnp.float32) + bout_ref[...]
    o_ref[...] = out.reshape(TB, S, E).astype(o_ref.dtype)


# ------------------------- wrapper-side constant tables -------------------------

def _rope_tables(seq_len, head_dim):
    """Non-interleaved RoPE cos/sin tables, shape (S, D/2); shared by all heads."""
    inv_freq = 1.0 / (10000.0 ** (jnp.arange(0, head_dim, 2, dtype=jnp.float32) / head_dim))
    t = jnp.arange(seq_len, dtype=jnp.float32)
    freqs = t[:, None] * inv_freq[None, :]                       # (S, D/2)
    return jnp.cos(freqs), jnp.sin(freqs)


def _vmem_limit_bytes():
    """Explicit scoped-VMEM budget with headroom (v5e/v6e ~96-100 MiB, v7x ~48 MiB)."""
    try:
        cap = getattr(pltpu.get_tpu_info(), "vmem_capacity_bytes", None)
        if cap:
            return int(min(cap * 3 // 4, 100 * 1024 * 1024))
    except Exception:
        pass
    return 48 * 1024 * 1024


def flash_mha_forward(x, params, *, n_head, batch_tile=None):
    """x: (B, S, E) float -> (B, S, E) float32; eval-mode FlashMultiHeadAttention."""
    B, S, E = x.shape
    assert E % n_head == 0
    D = E // n_head
    assert D % 2 == 0 and S >= 3

    if batch_tile is None:
        # A few hundred MXU rows per grid step, but keep >= 2 grid steps (when B >= 2)
        # so the batch axis can shard across TensorCores (v7x megacore).
        batch_tile = max(1, min(max(1, B // 2), max(1, 256 // S)))
        while B % batch_tile:
            batch_tile -= 1
    assert B % batch_tile == 0
    grid = (B // batch_tile,)

    cos, sin = _rope_tables(S, D)

    kernel = functools.partial(_flash_mha_kernel, n_head=n_head, head_dim=D)
    tile3 = lambda i: (i, 0, 0)   # pipelined per-batch-tile blocks
    res2 = lambda i: (0, 0)       # resident blocks: DMA'd once, reused across grid

    out = pl.pallas_call(
        kernel,
        out_shape=jax.ShapeDtypeStruct((B, S, E), jnp.float32),
        grid=grid,
        in_specs=[
            pl.BlockSpec((batch_tile, S, E), tile3),         # x tile
            pl.BlockSpec((E, 3 * E), res2),                  # Wqkv (bf16, resident)
            pl.BlockSpec((1, 3 * E), res2),                  # b_qkv
            pl.BlockSpec((3, 3 * E), res2),                  # dwconv weights (taps x channels)
            pl.BlockSpec((1, 3 * E), res2),                  # dwconv bias
            pl.BlockSpec((S, D // 2), res2),                 # RoPE cos table
            pl.BlockSpec((S, D // 2), res2),                 # RoPE sin table
            pl.BlockSpec((E, E), res2),                      # Wout (bf16, resident)
            pl.BlockSpec((1, E), res2),                      # b_out
        ],
        out_specs=pl.BlockSpec((batch_tile, S, E), tile3),
        compiler_params=pltpu.CompilerParams(
            dimension_semantics=("parallel",),               # shard batch tiles across TCs
            vmem_limit_bytes=_vmem_limit_bytes(),
        ),
    )(x.astype(jnp.float32),
      params["w_qkv"], params["b_qkv"], params["w_dw"], params["b_dw"],
      cos, sin, params["w_out"], params["b_out"])
    return out


# ------------------------------ params & reference ------------------------------

def make_params(key, n_embed, n_head):
    E = n_embed
    k1, k2, k3, k4 = jax.random.split(key, 4)

    def linear(k, fan_in, fan_out):
        kw, kb = jax.random.split(k)
        bound = 1.0 / (fan_in ** 0.5)
        w = jax.random.uniform(kw, (fan_in, fan_out), jnp.float32, -bound, bound)
        b = jax.random.uniform(kb, (1, fan_out), jnp.float32, -bound, bound)
        return w, b

    # Stored transposed vs nn.Linear.weight so y = x @ W + b.
    w_qkv, b_qkv = linear(k1, E, 3 * E)
    w_out, b_out = linear(k2, E, E)
    # Depthwise Conv1d(3E, 3E, kernel=3, groups=3E): weight (3E,1,3) -> stored (3, 3E).
    bound = 1.0 / (3 ** 0.5)
    w_dw = jax.random.uniform(k3, (3, 3 * E), jnp.float32, -bound, bound)
    b_dw = jax.random.uniform(k4, (1, 3 * E), jnp.float32, -bound, bound)
    return dict(
        w_qkv=w_qkv.astype(jnp.bfloat16), b_qkv=b_qkv,      # bf16 matmul weights (module is bf16)
        w_dw=w_dw, b_dw=b_dw,
        w_out=w_out.astype(jnp.bfloat16), b_out=b_out,
    )


def _reference_forward(x, params, n_head):
    """Pure-JAX reference, mirroring the kernel's bf16-matmul / f32-accumulate recipe."""
    B, S, E = x.shape
    D = E // n_head
    bf = lambda a: a.astype(jnp.bfloat16)

    qkv = jnp.einsum('bse,ef->bsf', bf(x.astype(jnp.float32)), bf(params['w_qkv']),
                     preferred_element_type=jnp.float32) + params['b_qkv'][0]
    # Causal depthwise conv (Conv1d(padding=2) followed by [..., :-2]).
    pad = jnp.pad(qkv, ((0, 0), (2, 0), (0, 0)))
    w_dw, b_dw = params['w_dw'], params['b_dw'][0]
    qkv = (pad[:, 0:S] * w_dw[0] + pad[:, 1:S + 1] * w_dw[1] + pad[:, 2:S + 2] * w_dw[2]
           + b_dw)
    qkv = qkv.reshape(B, S, 3, n_head, D)
    q, k, v = qkv[:, :, 0], qkv[:, :, 1], qkv[:, :, 2]        # (B, S, H, D)

    inv_freq = 1.0 / (10000.0 ** (jnp.arange(0, D, 2, dtype=jnp.float32) / D))
    freqs = jnp.arange(S, dtype=jnp.float32)[:, None] * inv_freq[None, :]
    cos = jnp.cos(freqs)[None, :, None, :]
    sin = jnp.sin(freqs)[None, :, None, :]

    def rope(u):
        u1, u2 = u[..., :D // 2], u[..., D // 2:]
        return jnp.concatenate([u1 * cos - u2 * sin, u2 * cos + u1 * sin], axis=-1)

    q, k = rope(q), rope(k)
    s = jnp.einsum('bqhd,bkhd->bhqk', bf(q), bf(k),
                   preferred_element_type=jnp.float32) / (D ** 0.5)
    p = jax.nn.softmax(s, axis=-1)
    ctx = jnp.einsum('bhqk,bkhd->bqhd', bf(p), bf(v), preferred_element_type=jnp.float32)
    out = jnp.einsum('bse,ef->bsf', bf(ctx.reshape(B, S, E)), bf(params['w_out']),
                     preferred_element_type=jnp.float32) + params['b_out'][0]
    return out


if __name__ == "__main__":
    # Config implied by the module: n_embed=32, n_head=4 -> head_size=8 (= rotary dim), seq=8.
    batch, seq, n_embed, n_head = 2, 8, 32, 4

    key = jax.random.PRNGKey(0)
    kx, kp = jax.random.split(key)
    x = jax.random.normal(kx, (batch, seq, n_embed), dtype=jnp.float32)
    params = make_params(kp, n_embed, n_head)

    out = flash_mha_forward(x, params, n_head=n_head)                        # grid=(2,), pipelined
    out_fused = flash_mha_forward(x, params, n_head=n_head, batch_tile=2)    # grid=(1,), single tile
    jax.block_until_ready((out, out_fused))

    ref = _reference_forward(x, params, n_head)
    assert out.shape == (batch, seq, n_embed)
    assert jnp.allclose(out, ref, atol=2e-2, rtol=2e-2)
    assert jnp.allclose(out_fused, ref, atol=2e-2, rtol=2e-2)

    print("KERNEL_OK")
</pallas_src>

<mosaic_0001>
module attributes {stable_mosaic.version = 11 : i64} {
  func.func @_flash_mha_kernel(%arg0: i32, %arg1: memref<1x8x32xf32, #tpu.memory_space<vmem>>, %arg2: memref<32x96xbf16, #tpu.memory_space<vmem>>, %arg3: memref<1x96xf32, #tpu.memory_space<vmem>>, %arg4: memref<3x96xf32, #tpu.memory_space<vmem>>, %arg5: memref<1x96xf32, #tpu.memory_space<vmem>>, %arg6: memref<8x4xf32, #tpu.memory_space<vmem>>, %arg7: memref<8x4xf32, #tpu.memory_space<vmem>>, %arg8: memref<32x32xbf16, #tpu.memory_space<vmem>>, %arg9: memref<1x32xf32, #tpu.memory_space<vmem>>, %arg10: memref<1x8x32xf32, #tpu.memory_space<vmem>>) attributes {dimension_semantics = [#tpu.dimension_semantics<parallel>], iteration_bounds = array<i64: 2>, scalar_prefetch = 0 : i64, scratch_operands = 0 : i64, tpu.core_type = #tpu.core_type<tc>, window_params = [{transform_indices = @transform_0, window_bounds = array<i64: 1, 8, 32>}, {pipeline_mode = #tpu.pipeline_mode<synchronous>, transform_indices = @transform_1, window_bounds = array<i64: 32, 96>}, {pipeline_mode = #tpu.pipeline_mode<synchronous>, transform_indices = @transform_2, window_bounds = array<i64: 1, 96>}, {pipeline_mode = #tpu.pipeline_mode<synchronous>, transform_indices = @transform_3, window_bounds = array<i64: 3, 96>}, {pipeline_mode = #tpu.pipeline_mode<synchronous>, transform_indices = @transform_4, window_bounds = array<i64: 1, 96>}, {pipeline_mode = #tpu.pipeline_mode<synchronous>, transform_indices = @transform_5, window_bounds = array<i64: 8, 4>}, {pipeline_mode = #tpu.pipeline_mode<synchronous>, transform_indices = @transform_6, window_bounds = array<i64: 8, 4>}, {pipeline_mode = #tpu.pipeline_mode<synchronous>, transform_indices = @transform_7, window_bounds = array<i64: 32, 32>}, {pipeline_mode = #tpu.pipeline_mode<synchronous>, transform_indices = @transform_8, window_bounds = array<i64: 1, 32>}, {transform_indices = @transform_9, window_bounds = array<i64: 1, 8, 32>}]} {
    %c0 = arith.constant 0 : index
    %c0_0 = arith.constant 0 : index
    %c0_1 = arith.constant 0 : index
    %0 = vector.load %arg1[%c0, %c0_0, %c0_1] : memref<1x8x32xf32, #tpu.memory_space<vmem>>, vector<1x8x32xf32>
    %1 = vector.shape_cast %0 : vector<1x8x32xf32> to vector<8x32xf32>
    %2 = arith.truncf %1 : vector<8x32xf32> to vector<8x32xbf16>
    %c0_2 = arith.constant 0 : index
    %c0_3 = arith.constant 0 : index
    %3 = vector.load %arg2[%c0_2, %c0_3] : memref<32x96xbf16, #tpu.memory_space<vmem>>, vector<32x96xbf16>
    %cst = arith.constant dense<0.000000e+00> : vector<8x96xf32>
    %4 = tpu.matmul %2, %3, %cst {dimension_numbers = #tpu.dot_dimension_numbers<[1], [0], [0], [1], [0, 0, 1, 1], [], []>} : vector<8x32xbf16>, vector<32x96xbf16>, vector<8x96xf32> -> vector<8x96xf32>
    %c0_4 = arith.constant 0 : index
    %c0_5 = arith.constant 0 : index
    %5 = vector.load %arg3[%c0_4, %c0_5] : memref<1x96xf32, #tpu.memory_space<vmem>>, vector<1x96xf32>
    %6 = vector.broadcast %5 : vector<1x96xf32> to vector<8x96xf32>
    %7 = arith.addf %4, %6 : vector<8x96xf32>
    %8 = vector.shape_cast %7 : vector<8x96xf32> to vector<1x8x96xf32>
    %c0_6 = arith.constant 0 : index
    %c0_7 = arith.constant 0 : index
    %9 = vector.load %arg4[%c0_6, %c0_7] : memref<3x96xf32, #tpu.memory_space<vmem>>, vector<3x96xf32>
    %cst_8 = arith.constant 0.000000e+00 : f32
    %10 = vector.broadcast %cst_8 : f32 to vector<1x1x96xf32>
    %cst_9 = arith.constant 0.000000e+00 : f32
    %11 = vector.broadcast %cst_9 : f32 to vector<1x2x96xf32>
    %12 = vector.extract_strided_slice %8 {offsets = [0, 0, 0], sizes = [1, 7, 96], strides = [1, 1, 1]} : vector<1x8x96xf32> to vector<1x7x96xf32>
    %13 = tpu.concatenate %10, %12 in 1 : vector<1x1x96xf32>, vector<1x7x96xf32> -> vector<1x8x96xf32>
    %14 = vector.extract_strided_slice %8 {offsets = [0, 0, 0], sizes = [1, 6, 96], strides = [1, 1, 1]} : vector<1x8x96xf32> to vector<1x6x96xf32>
    %15 = tpu.concatenate %11, %14 in 1 : vector<1x2x96xf32>, vector<1x6x96xf32> -> vector<1x8x96xf32>
    %16 = vector.extract_strided_slice %9 {offsets = [2, 0], sizes = [1, 96], strides = [1, 1]} : vector<3x96xf32> to vector<1x96xf32>
    %17 = vector.shape_cast %16 : vector<1x96xf32> to vector<1x1x96xf32>
    %18 = vector.broadcast %17 : vector<1x1x96xf32> to vector<1x8x96xf32>
    %19 = arith.mulf %8, %18 : vector<1x8x96xf32>
    %20 = vector.extract_strided_slice %9 {offsets = [1, 0], sizes = [1, 96], strides = [1, 1]} : vector<3x96xf32> to vector<1x96xf32>
    %21 = vector.shape_cast %20 : vector<1x96xf32> to vector<1x1x96xf32>
    %22 = vector.broadcast %21 : vector<1x1x96xf32> to vector<1x8x96xf32>
    %23 = arith.mulf %13, %22 : vector<1x8x96xf32>
    %24 = arith.addf %19, %23 : vector<1x8x96xf32>
    %25 = vector.extract_strided_slice %9 {offsets = [0, 0], sizes = [1, 96], strides = [1, 1]} : vector<3x96xf32> to vector<1x96xf32>
    %26 = vector.shape_cast %25 : vector<1x96xf32> to vector<1x1x96xf32>
    %27 = vector.broadcast %26 : vector<1x1x96xf32> to vector<1x8x96xf32>
    %28 = arith.mulf %15, %27 : vector<1x8x96xf32>
    %29 = arith.addf %24, %28 : vector<1x8x96xf32>
    %c0_10 = arith.constant 0 : index
    %c0_11 = arith.constant 0 : index
    %30 = vector.load %arg5[%c0_10, %c0_11] : memref<1x96xf32, #tpu.memory_space<vmem>>, vector<1x96xf32>
    %31 = vector.shape_cast %30 : vector<1x96xf32> to vector<1x1x96xf32>
    %32 = vector.broadcast %31 : vector<1x1x96xf32> to vector<1x8x96xf32>
    %33 = arith.addf %29, %32 : vector<1x8x96xf32>
    %c0_12 = arith.constant 0 : index
    %c0_13 = arith.constant 0 : index
    %34 = vector.load %arg6[%c0_12, %c0_13] : memref<8x4xf32, #tpu.memory_space<vmem>>, vector<8x4xf32>
    %c0_14 = arith.constant 0 : index
    %c0_15 = arith.constant 0 : index
    %35 = vector.load %arg7[%c0_14, %c0_15] : memref<8x4xf32, #tpu.memory_space<vmem>>, vector<8x4xf32>
    %36 = vector.extract_strided_slice %33 {offsets = [0, 0, 0], sizes = [1, 8, 8], strides = [1, 1, 1]} : vector<1x8x96xf32> to vector<1x8x8xf32>
    %37 = vector.extract_strided_slice %36 {offsets = [0, 0, 0], sizes = [1, 8, 4], strides = [1, 1, 1]} : vector<1x8x8xf32> to vector<1x8x4xf32>
    %38 = vector.extract_strided_slice %36 {offsets = [0, 0, 4], sizes = [1, 8, 4], strides = [1, 1, 1]} : vector<1x8x8xf32> to vector<1x8x4xf32>
    %39 = vector.shape_cast %34 : vector<8x4xf32> to vector<1x8x4xf32>
    %40 = arith.mulf %37, %39 : vector<1x8x4xf32>
    %41 = vector.shape_cast %35 : vector<8x4xf32> to vector<1x8x4xf32>
    %42 = arith.mulf %38, %41 : vector<1x8x4xf32>
    %43 = arith.subf %40, %42 : vector<1x8x4xf32>
    %44 = vector.shape_cast %34 : vector<8x4xf32> to vector<1x8x4xf32>
    %45 = arith.mulf %38, %44 : vector<1x8x4xf32>
    %46 = vector.shape_cast %35 : vector<8x4xf32> to vector<1x8x4xf32>
    %47 = arith.mulf %37, %46 : vector<1x8x4xf32>
    %48 = arith.addf %45, %47 : vector<1x8x4xf32>
    %49 = tpu.concatenate %43, %48 in 2 : vector<1x8x4xf32>, vector<1x8x4xf32> -> vector<1x8x8xf32>
    %cst_16 = arith.constant 0.353553385 : f32
    %50 = vector.broadcast %cst_16 : f32 to vector<1x8x8xf32>
    %51 = arith.mulf %49, %50 : vector<1x8x8xf32>
    %52 = arith.truncf %51 : vector<1x8x8xf32> to vector<1x8x8xbf16>
    %53 = vector.extract_strided_slice %33 {offsets = [0, 0, 32], sizes = [1, 8, 8], strides = [1, 1, 1]} : vector<1x8x96xf32> to vector<1x8x8xf32>
    %54 = vector.extract_strided_slice %53 {offsets = [0, 0, 0], sizes = [1, 8, 4], strides = [1, 1, 1]} : vector<1x8x8xf32> to vector<1x8x4xf32>
    %55 = vector.extract_strided_slice %53 {offsets = [0, 0, 4], sizes = [1, 8, 4], strides = [1, 1, 1]} : vector<1x8x8xf32> to vector<1x8x4xf32>
    %56 = vector.shape_cast %34 : vector<8x4xf32> to vector<1x8x4xf32>
    %57 = arith.mulf %54, %56 : vector<1x8x4xf32>
    %58 = vector.shape_cast %35 : vector<8x4xf32> to vector<1x8x4xf32>
    %59 = arith.mulf %55, %58 : vector<1x8x4xf32>
    %60 = arith.subf %57, %59 : vector<1x8x4xf32>
    %61 = vector.shape_cast %34 : vector<8x4xf32> to vector<1x8x4xf32>
    %62 = arith.mulf %55, %61 : vector<1x8x4xf32>
    %63 = vector.shape_cast %35 : vector<8x4xf32> to vector<1x8x4xf32>
    %64 = arith.mulf %54, %63 : vector<1x8x4xf32>
    %65 = arith.addf %62, %64 : vector<1x8x4xf32>
    %66 = tpu.concatenate %60, %65 in 2 : vector<1x8x4xf32>, vector<1x8x4xf32> -> vector<1x8x8xf32>
    %67 = arith.truncf %66 : vector<1x8x8xf32> to vector<1x8x8xbf16>
    %68 = vector.extract_strided_slice %33 {offsets = [0, 0, 64], sizes = [1, 8, 8], strides = [1, 1, 1]} : vector<1x8x96xf32> to vector<1x8x8xf32>
    %69 = arith.truncf %68 : vector<1x8x8xf32> to vector<1x8x8xbf16>
    "tpu.trace_start"() <{level = 10 : i32, message = "bqd,bkd->bqk"}> : () -> ()
    %cst_17 = arith.constant dense<0.000000e+00> : vector<1x8x8xf32>
    %70 = tpu.matmul %52, %67, %cst_17 {dimension_numbers = #tpu.dot_dimension_numbers<[2], [2], [1], [1], [0, 0, 0, 1, 1, 1], [0], [0]>} : vector<1x8x8xbf16>, vector<1x8x8xbf16>, vector<1x8x8xf32> -> vector<1x8x8xf32>
    "tpu.trace_stop"() : () -> ()
    %cst_18 = arith.constant dense<0xFF800000> : vector<1x8xf32>
    %71 = vector.multi_reduction <maximumf>, %70, %cst_18 [2] : vector<1x8x8xf32> to vector<1x8xf32>
    %72 = vector.shape_cast %71 : vector<1x8xf32> to vector<1x8x1xf32>
    %73 = vector.broadcast %72 : vector<1x8x1xf32> to vector<1x8x8xf32>
    %74 = arith.subf %70, %73 : vector<1x8x8xf32>
    %75 = math.exp %74 : vector<1x8x8xf32>
    %cst_19 = arith.constant dense<0.000000e+00> : vector<1x8xf32>
    %76 = vector.multi_reduction <add>, %75, %cst_19 [2] : vector<1x8x8xf32> to vector<1x8xf32>
    %77 = vector.shape_cast %76 : vector<1x8xf32> to vector<1x8x1xf32>
    %78 = arith.truncf %75 : vector<1x8x8xf32> to vector<1x8x8xbf16>
    "tpu.trace_start"() <{level = 10 : i32, message = "bqk,bkd->bqd"}> : () -> ()
    %cst_20 = arith.constant dense<0.000000e+00> : vector<1x8x8xf32>
    %79 = tpu.matmul %78, %69, %cst_20 {dimension_numbers = #tpu.dot_dimension_numbers<[2], [1], [1], [2], [0, 0, 0, 1, 1, 2], [0], [0]>} : vector<1x8x8xbf16>, vector<1x8x8xbf16>, vector<1x8x8xf32> -> vector<1x8x8xf32>
    "tpu.trace_stop"() : () -> ()
    %80 = tpu.reciprocal %77 {approx = true} : vector<1x8x1xf32> -> vector<1x8x1xf32>
    %81 = vector.broadcast %80 : vector<1x8x1xf32> to vector<1x8x8xf32>
    %82 = arith.mulf %79, %81 : vector<1x8x8xf32>
    %83 = vector.extract_strided_slice %33 {offsets = [0, 0, 8], sizes = [1, 8, 8], strides = [1, 1, 1]} : vector<1x8x96xf32> to vector<1x8x8xf32>
    %84 = vector.extract_strided_slice %83 {offsets = [0, 0, 0], sizes = [1, 8, 4], strides = [1, 1, 1]} : vector<1x8x8xf32> to vector<1x8x4xf32>
    %85 = vector.extract_strided_slice %83 {offsets = [0, 0, 4], sizes = [1, 8, 4], strides = [1, 1, 1]} : vector<1x8x8xf32> to vector<1x8x4xf32>
    %86 = vector.shape_cast %34 : vector<8x4xf32> to vector<1x8x4xf32>
    %87 = arith.mulf %84, %86 : vector<1x8x4xf32>
    %88 = vector.shape_cast %35 : vector<8x4xf32> to vector<1x8x4xf32>
    %89 = arith.mulf %85, %88 : vector<1x8x4xf32>
    %90 = arith.subf %87, %89 : vector<1x8x4xf32>
    %91 = vector.shape_cast %34 : vector<8x4xf32> to vector<1x8x4xf32>
    %92 = arith.mulf %85, %91 : vector<1x8x4xf32>
    %93 = vector.shape_cast %35 : vector<8x4xf32> to vector<1x8x4xf32>
    %94 = arith.mulf %84, %93 : vector<1x8x4xf32>
    %95 = arith.addf %92, %94 : vector<1x8x4xf32>
    %96 = tpu.concatenate %90, %95 in 2 : vector<1x8x4xf32>, vector<1x8x4xf32> -> vector<1x8x8xf32>
    %cst_21 = arith.constant 0.353553385 : f32
    %97 = vector.broadcast %cst_21 : f32 to vector<1x8x8xf32>
    %98 = arith.mulf %96, %97 : vector<1x8x8xf32>
    %99 = arith.truncf %98 : vector<1x8x8xf32> to vector<1x8x8xbf16>
    %100 = vector.extract_strided_slice %33 {offsets = [0, 0, 40], sizes = [1, 8, 8], strides = [1, 1, 1]} : vector<1x8x96xf32> to vector<1x8x8xf32>
    %101 = vector.extract_strided_slice %100 {offsets = [0, 0, 0], sizes = [1, 8, 4], strides = [1, 1, 1]} : vector<1x8x8xf32> to vector<1x8x4xf32>
    %102 = vector.extract_strided_slice %100 {offsets = [0, 0, 4], sizes = [1, 8, 4], strides = [1, 1, 1]} : vector<1x8x8xf32> to vector<1x8x4xf32>
    %103 = vector.shape_cast %34 : vector<8x4xf32> to vector<1x8x4xf32>
    %104 = arith.mulf %101, %103 : vector<1x8x4xf32>
    %105 = vector.shape_cast %35 : vector<8x4xf32> to vector<1x8x4xf32>
    %106 = arith.mulf %102, %105 : vector<1x8x4xf32>
    %107 = arith.subf %104, %106 : vector<1x8x4xf32>
    %108 = vector.shape_cast %34 : vector<8x4xf32> to vector<1x8x4xf32>
    %109 = arith.mulf %102, %108 : vector<1x8x4xf32>
    %110 = vector.shape_cast %35 : vector<8x4xf32> to vector<1x8x4xf32>
    %111 = arith.mulf %101, %110 : vector<1x8x4xf32>
    %112 = arith.addf %109, %111 : vector<1x8x4xf32>
    %113 = tpu.concatenate %107, %112 in 2 : vector<1x8x4xf32>, vector<1x8x4xf32> -> vector<1x8x8xf32>
    %114 = arith.truncf %113 : vector<1x8x8xf32> to vector<1x8x8xbf16>
    %115 = vector.extract_strided_slice %33 {offsets = [0, 0, 72], sizes = [1, 8, 8], strides = [1, 1, 1]} : vector<1x8x96xf32> to vector<1x8x8xf32>
    %116 = arith.truncf %115 : vector<1x8x8xf32> to vector<1x8x8xbf16>
    "tpu.trace_start"() <{level = 10 : i32, message = "bqd,bkd->bqk"}> : () -> ()
    %cst_22 = arith.constant dense<0.000000e+00> : vector<1x8x8xf32>
    %117 = tpu.matmul %99, %114, %cst_22 {dimension_numbers = #tpu.dot_dimension_numbers<[2], [2], [1], [1], [0, 0, 0, 1, 1, 1], [0], [0]>} : vector<1x8x8xbf16>, vector<1x8x8xbf16>, vector<1x8x8xf32> -> vector<1x8x8xf32>
    "tpu.trace_stop"() : () -> ()
    %cst_23 = arith.constant dense<0xFF800000> : vector<1x8xf32>
    %118 = vector.multi_reduction <maximumf>, %117, %cst_23 [2] : vector<1x8x8xf32> to vector<1x8xf32>
    %119 = vector.shape_cast %118 : vector<1x8xf32> to vector<1x8x1xf32>
    %120 = vector.broadcast %119 : vector<1x8x1xf32> to vector<1x8x8xf32>
    %121 = arith.subf %117, %120 : vector<1x8x8xf32>
    %122 = math.exp %121 : vector<1x8x8xf32>
    %cst_24 = arith.constant dense<0.000000e+00> : vector<1x8xf32>
    %123 = vector.multi_reduction <add>, %122, %cst_24 [2] : vector<1x8x8xf32> to vector<1x8xf32>
    %124 = vector.shape_cast %123 : vector<1x8xf32> to vector<1x8x1xf32>
    %125 = arith.truncf %122 : vector<1x8x8xf32> to vector<1x8x8xbf16>
    "tpu.trace_start"() <{level = 10 : i32, message = "bqk,bkd->bqd"}> : () -> ()
    %cst_25 = arith.constant dense<0.000000e+00> : vector<1x8x8xf32>
    %126 = tpu.matmul %125, %116, %cst_25 {dimension_numbers = #tpu.dot_dimension_numbers<[2], [1], [1], [2], [0, 0, 0, 1, 1, 2], [0], [0]>} : vector<1x8x8xbf16>, vector<1x8x8xbf16>, vector<1x8x8xf32> -> vector<1x8x8xf32>
    "tpu.trace_stop"() : () -> ()
    %127 = tpu.reciprocal %124 {approx = true} : vector<1x8x1xf32> -> vector<1x8x1xf32>
    %128 = vector.broadcast %127 : vector<1x8x1xf32> to vector<1x8x8xf32>
    %129 = arith.mulf %126, %128 : vector<1x8x8xf32>
    %130 = vector.extract_strided_slice %33 {offsets = [0, 0, 16], sizes = [1, 8, 8], strides = [1, 1, 1]} : vector<1x8x96xf32> to vector<1x8x8xf32>
    %131 = vector.extract_strided_slice %130 {offsets = [0, 0, 0], sizes = [1, 8, 4], strides = [1, 1, 1]} : vector<1x8x8xf32> to vector<1x8x4xf32>
    %132 = vector.extract_strided_slice %130 {offsets = [0, 0, 4], sizes = [1, 8, 4], strides = [1, 1, 1]} : vector<1x8x8xf32> to vector<1x8x4xf32>
    %133 = vector.shape_cast %34 : vector<8x4xf32> to vector<1x8x4xf32>
    %134 = arith.mulf %131, %133 : vector<1x8x4xf32>
    %135 = vector.shape_cast %35 : vector<8x4xf32> to vector<1x8x4xf32>
    %136 = arith.mulf %132, %135 : vector<1x8x4xf32>
    %137 = arith.subf %134, %136 : vector<1x8x4xf32>
    %138 = vector.shape_cast %34 : vector<8x4xf32> to vector<1x8x4xf32>
    %139 = arith.mulf %132, %138 : vector<1x8x4xf32>
    %140 = vector.shape_cast %35 : vector<8x4xf32> to vector<1x8x4xf32>
    %141 = arith.mulf %131, %140 : vector<1x8x4xf32>
    %142 = arith.addf %139, %141 : vector<1x8x4xf32>
    %143 = tpu.concatenate %137, %142 in 2 : vector<1x8x4xf32>, vector<1x8x4xf32> -> vector<1x8x8xf32>
    %cst_26 = arith.constant 0.353553385 : f32
    %144 = vector.broadcast %cst_26 : f32 to vector<1x8x8xf32>
    %145 = arith.mulf %143, %144 : vector<1x8x8xf32>
    %146 = arith.truncf %145 : vector<1x8x8xf32> to vector<1x8x8xbf16>
    %147 = vector.extract_strided_slice %33 {offsets = [0, 0, 48], sizes = [1, 8, 8], strides = [1, 1, 1]} : vector<1x8x96xf32> to vector<1x8x8xf32>
    %148 = vector.extract_strided_slice %147 {offsets = [0, 0, 0], sizes = [1, 8, 4], strides = [1, 1, 1]} : vector<1x8x8xf32> to vector<1x8x4xf32>
    %149 = vector.extract_strided_slice %147 {offsets = [0, 0, 4], sizes = [1, 8, 4], strides = [1, 1, 1]} : vector<1x8x8xf32> to vector<1x8x4xf32>
    %150 = vector.shape_cast %34 : vector<8x4xf32> to vector<1x8x4xf32>
    %151 = arith.mulf %148, %150 : vector<1x8x4xf32>
    %152 = vector.shape_cast %35 : vector<8x4xf32> to vector<1x8x4xf32>
    %153 = arith.mulf %149, %152 : vector<1x8x4xf32>
    %154 = arith.subf %151, %153 : vector<1x8x4xf32>
    %155 = vector.shape_cast %34 : vector<8x4xf32> to vector<1x8x4xf32>
    %156 = arith.mulf %149, %155 : vector<1x8x4xf32>
    %157 = vector.shape_cast %35 : vector<8x4xf32> to vector<1x8x4xf32>
    %158 = arith.mulf %148, %157 : vector<1x8x4xf32>
    %159 = arith.addf %156, %158 : vector<1x8x4xf32>
    %160 = tpu.concatenate %154, %159 in 2 : vector<1x8x4xf32>, vector<1x8x4xf32> -> vector<1x8x8xf32>
    %161 = arith.truncf %160 : vector<1x8x8xf32> to vector<1x8x8xbf16>
    %162 = vector.extract_strided_slice %33 {offsets = [0, 0, 80], sizes = [1, 8, 8], strides = [1, 1, 1]} : vector<1x8x96xf32> to vector<1x8x8xf32>
    %163 = arith.truncf %162 : vector<1x8x8xf32> to vector<1x8x8xbf16>
    "tpu.trace_start"() <{level = 10 : i32, message = "bqd,bkd->bqk"}> : () -> ()
    %cst_27 = arith.constant dense<0.000000e+00> : vector<1x8x8xf32>
    %164 = tpu.matmul %146, %161, %cst_27 {dimension_numbers = #tpu.dot_dimension_numbers<[2], [2], [1], [1], [0, 0, 0, 1, 1, 1], [0], [0]>} : vector<1x8x8xbf16>, vector<1x8x8xbf16>, vector<1x8x8xf32> -> vector<1x8x8xf32>
    "tpu.trace_stop"() : () -> ()
    %cst_28 = arith.constant dense<0xFF800000> : vector<1x8xf32>
    %165 = vector.multi_reduction <maximumf>, %164, %cst_28 [2] : vector<1x8x8xf32> to vector<1x8xf32>
    %166 = vector.shape_cast %165 : vector<1x8xf32> to vector<1x8x1xf32>
    %167 = vector.broadcast %166 : vector<1x8x1xf32> to vector<1x8x8xf32>
    %168 = arith.subf %164, %167 : vector<1x8x8xf32>
    %169 = math.exp %168 : vector<1x8x8xf32>
    %cst_29 = arith.constant dense<0.000000e+00> : vector<1x8xf32>
    %170 = vector.multi_reduction <add>, %169, %cst_29 [2] : vector<1x8x8xf32> to vector<1x8xf32>
    %171 = vector.shape_cast %170 : vector<1x8xf32> to vector<1x8x1xf32>
    %172 = arith.truncf %169 : vector<1x8x8xf32> to vector<1x8x8xbf16>
    "tpu.trace_start"() <{level = 10 : i32, message = "bqk,bkd->bqd"}> : () -> ()
    %cst_30 = arith.constant dense<0.000000e+00> : vector<1x8x8xf32>
    %173 = tpu.matmul %172, %163, %cst_30 {dimension_numbers = #tpu.dot_dimension_numbers<[2], [1], [1], [2], [0, 0, 0, 1, 1, 2], [0], [0]>} : vector<1x8x8xbf16>, vector<1x8x8xbf16>, vector<1x8x8xf32> -> vector<1x8x8xf32>
    "tpu.trace_stop"() : () -> ()
    %174 = tpu.reciprocal %171 {approx = true} : vector<1x8x1xf32> -> vector<1x8x1xf32>
    %175 = vector.broadcast %174 : vector<1x8x1xf32> to vector<1x8x8xf32>
    %176 = arith.mulf %173, %175 : vector<1x8x8xf32>
    %177 = vector.extract_strided_slice %33 {offsets = [0, 0, 24], sizes = [1, 8, 8], strides = [1, 1, 1]} : vector<1x8x96xf32> to vector<1x8x8xf32>
    %178 = vector.extract_strided_slice %177 {offsets = [0, 0, 0], sizes = [1, 8, 4], strides = [1, 1, 1]} : vector<1x8x8xf32> to vector<1x8x4xf32>
    %179 = vector.extract_strided_slice %177 {offsets = [0, 0, 4], sizes = [1, 8, 4], strides = [1, 1, 1]} : vector<1x8x8xf32> to vector<1x8x4xf32>
    %180 = vector.shape_cast %34 : vector<8x4xf32> to vector<1x8x4xf32>
    %181 = arith.mulf %178, %180 : vector<1x8x4xf32>
    %182 = vector.shape_cast %35 : vector<8x4xf32> to vector<1x8x4xf32>
    %183 = arith.mulf %179, %182 : vector<1x8x4xf32>
    %184 = arith.subf %181, %183 : vector<1x8x4xf32>
    %185 = vector.shape_cast %34 : vector<8x4xf32> to vector<1x8x4xf32>
    %186 = arith.mulf %179, %185 : vector<1x8x4xf32>
    %187 = vector.shape_cast %35 : vector<8x4xf32> to vector<1x8x4xf32>
    %188 = arith.mulf %178, %187 : vector<1x8x4xf32>
    %189 = arith.addf %186, %188 : vector<1x8x4xf32>
    %190 = tpu.concatenate %184, %189 in 2 : vector<1x8x4xf32>, vector<1x8x4xf32> -> vector<1x8x8xf32>
    %cst_31 = arith.constant 0.353553385 : f32
    %191 = vector.broadcast %cst_31 : f32 to vector<1x8x8xf32>
    %192 = arith.mulf %190, %191 : vector<1x8x8xf32>
    %193 = arith.truncf %192 : vector<1x8x8xf32> to vector<1x8x8xbf16>
    %194 = vector.extract_strided_slice %33 {offsets = [0, 0, 56], sizes = [1, 8, 8], strides = [1, 1, 1]} : vector<1x8x96xf32> to vector<1x8x8xf32>
    %195 = vector.extract_strided_slice %194 {offsets = [0, 0, 0], sizes = [1, 8, 4], strides = [1, 1, 1]} : vector<1x8x8xf32> to vector<1x8x4xf32>
    %196 = vector.extract_strided_slice %194 {offsets = [0, 0, 4], sizes = [1, 8, 4], strides = [1, 1, 1]} : vector<1x8x8xf32> to vector<1x8x4xf32>
    %197 = vector.shape_cast %34 : vector<8x4xf32> to vector<1x8x4xf32>
    %198 = arith.mulf %195, %197 : vector<1x8x4xf32>
    %199 = vector.shape_cast %35 : vector<8x4xf32> to vector<1x8x4xf32>
    %200 = arith.mulf %196, %199 : vector<1x8x4xf32>
    %201 = arith.subf %198, %200 : vector<1x8x4xf32>
    %202 = vector.shape_cast %34 : vector<8x4xf32> to vector<1x8x4xf32>
    %203 = arith.mulf %196, %202 : vector<1x8x4xf32>
    %204 = vector.shape_cast %35 : vector<8x4xf32> to vector<1x8x4xf32>
    %205 = arith.mulf %195, %204 : vector<1x8x4xf32>
    %206 = arith.addf %203, %205 : vector<1x8x4xf32>
    %207 = tpu.concatenate %201, %206 in 2 : vector<1x8x4xf32>, vector<1x8x4xf32> -> vector<1x8x8xf32>
    %208 = arith.truncf %207 : vector<1x8x8xf32> to vector<1x8x8xbf16>
    %209 = vector.extract_strided_slice %33 {offsets = [0, 0, 88], sizes = [1, 8, 8], strides = [1, 1, 1]} : vector<1x8x96xf32> to vector<1x8x8xf32>
    %210 = arith.truncf %209 : vector<1x8x8xf32> to vector<1x8x8xbf16>
    "tpu.trace_start"() <{level = 10 : i32, message = "bqd,bkd->bqk"}> : () -> ()
    %cst_32 = arith.constant dense<0.000000e+00> : vector<1x8x8xf32>
    %211 = tpu.matmul %193, %208, %cst_32 {dimension_numbers = #tpu.dot_dimension_numbers<[2], [2], [1], [1], [0, 0, 0, 1, 1, 1], [0], [0]>} : vector<1x8x8xbf16>, vector<1x8x8xbf16>, vector<1x8x8xf32> -> vector<1x8x8xf32>
    "tpu.trace_stop"() : () -> ()
    %cst_33 = arith.constant dense<0xFF800000> : vector<1x8xf32>
    %212 = vector.multi_reduction <maximumf>, %211, %cst_33 [2] : vector<1x8x8xf32> to vector<1x8xf32>
    %213 = vector.shape_cast %212 : vector<1x8xf32> to vector<1x8x1xf32>
    %214 = vector.broadcast %213 : vector<1x8x1xf32> to vector<1x8x8xf32>
    %215 = arith.subf %211, %214 : vector<1x8x8xf32>
    %216 = math.exp %215 : vector<1x8x8xf32>
    %cst_34 = arith.constant dense<0.000000e+00> : vector<1x8xf32>
    %217 = vector.multi_reduction <add>, %216, %cst_34 [2] : vector<1x8x8xf32> to vector<1x8xf32>
    %218 = vector.shape_cast %217 : vector<1x8xf32> to vector<1x8x1xf32>
    %219 = arith.truncf %216 : vector<1x8x8xf32> to vector<1x8x8xbf16>
    "tpu.trace_start"() <{level = 10 : i32, message = "bqk,bkd->bqd"}> : () -> ()
    %cst_35 = arith.constant dense<0.000000e+00> : vector<1x8x8xf32>
    %220 = tpu.matmul %219, %210, %cst_35 {dimension_numbers = #tpu.dot_dimension_numbers<[2], [1], [1], [2], [0, 0, 0, 1, 1, 2], [0], [0]>} : vector<1x8x8xbf16>, vector<1x8x8xbf16>, vector<1x8x8xf32> -> vector<1x8x8xf32>
    "tpu.trace_stop"() : () -> ()
    %221 = tpu.reciprocal %218 {approx = true} : vector<1x8x1xf32> -> vector<1x8x1xf32>
    %222 = vector.broadcast %221 : vector<1x8x1xf32> to vector<1x8x8xf32>
    %223 = arith.mulf %220, %222 : vector<1x8x8xf32>
    %224 = tpu.concatenate %82, %129, %176, %223 in 2 : vector<1x8x8xf32>, vector<1x8x8xf32>, vector<1x8x8xf32>, vector<1x8x8xf32> -> vector<1x8x32xf32>
    %225 = vector.shape_cast %224 : vector<1x8x32xf32> to vector<8x32xf32>
    %226 = arith.truncf %225 : vector<8x32xf32> to vector<8x32xbf16>
    %c0_36 = arith.constant 0 : index
    %c0_37 = arith.constant 0 : index
    %227 = vector.load %arg8[%c0_36, %c0_37] : memref<32x32xbf16, #tpu.memory_space<vmem>>, vector<32x32xbf16>
    %cst_38 = arith.constant dense<0.000000e+00> : vector<8x32xf32>
    %228 = tpu.matmul %226, %227, %cst_38 {dimension_numbers = #tpu.dot_dimension_numbers<[1], [0], [0], [1], [0, 0, 1, 1], [], []>} : vector<8x32xbf16>, vector<32x32xbf16>, vector<8x32xf32> -> vector<8x32xf32>
    %c0_39 = arith.constant 0 : index
    %c0_40 = arith.constant 0 : index
    %229 = vector.load %arg9[%c0_39, %c0_40] : memref<1x32xf32, #tpu.memory_space<vmem>>, vector<1x32xf32>
    %230 = vector.broadcast %229 : vector<1x32xf32> to vector<8x32xf32>
    %231 = arith.addf %228, %230 : vector<8x32xf32>
    %232 = vector.shape_cast %231 : vector<8x32xf32> to vector<1x8x32xf32>
    %c0_41 = arith.constant 0 : index
    %c0_42 = arith.constant 0 : index
    %c0_43 = arith.constant 0 : index
    %233 = vector.load %arg10[%c0_41, %c0_42, %c0_43] : memref<1x8x32xf32, #tpu.memory_space<vmem>>, vector<1x8x32xf32>
    tpu.vector_store %arg10[%c0_41, %c0_42, %c0_43], %232 {strides = array<i32>} : memref<1x8x32xf32, #tpu.memory_space<vmem>>, vector<1x8x32xf32>,
    return
  }
  func.func @transform_0(%arg0: i32) -> (i32, i32, i32) {
    %c0_i32 = arith.constant 0 : i32
    %c0_i32_0 = arith.constant 0 : i32
    %c0_i32_1 = arith.constant 0 : i32
    return %arg0, %c0_i32, %c0_i32_0 : i32, i32, i32
  }
  func.func @transform_1(%arg0: i32) -> (i32, i32) {
    %c0_i32 = arith.constant 0 : i32
    %c0_i32_0 = arith.constant 0 : i32
    %c0_i32_1 = arith.constant 0 : i32
    return %c0_i32, %c0_i32_0 : i32, i32
  }
  func.func @transform_2(%arg0: i32) -> (i32, i32) {
    %c0_i32 = arith.constant 0 : i32
    %c0_i32_0 = arith.constant 0 : i32
    %c0_i32_1 = arith.constant 0 : i32
    return %c0_i32, %c0_i32_0 : i32, i32
  }
  func.func @transform_3(%arg0: i32) -> (i32, i32) {
    %c0_i32 = arith.constant 0 : i32
    %c0_i32_0 = arith.constant 0 : i32
    %c0_i32_1 = arith.constant 0 : i32
    return %c0_i32, %c0_i32_0 : i32, i32
  }
  func.func @transform_4(%arg0: i32) -> (i32, i32) {
    %c0_i32 = arith.constant 0 : i32
    %c0_i32_0 = arith.constant 0 : i32
    %c0_i32_1 = arith.constant 0 : i32
    return %c0_i32, %c0_i32_0 : i32, i32
  }
  func.func @transform_5(%arg0: i32) -> (i32, i32) {
    %c0_i32 = arith.constant 0 : i32
    %c0_i32_0 = arith.constant 0 : i32
    %c0_i32_1 = arith.constant 0 : i32
    return %c0_i32, %c0_i32_0 : i32, i32
  }
  func.func @transform_6(%arg0: i32) -> (i32, i32) {
    %c0_i32 = arith.constant 0 : i32
    %c0_i32_0 = arith.constant 0 : i32
    %c0_i32_1 = arith.constant 0 : i32
    return %c0_i32, %c0_i32_0 : i32, i32
  }
  func.func @transform_7(%arg0: i32) -> (i32, i32) {
    %c0_i32 = arith.constant 0 : i32
    %c0_i32_0 = arith.constant 0 : i32
    %c0_i32_1 = arith.constant 0 : i32
    return %c0_i32, %c0_i32_0 : i32, i32
  }
  func.func @transform_8(%arg0: i32) -> (i32, i32) {
    %c0_i32 = arith.constant 0 : i32
    %c0_i32_0 = arith.constant 0 : i32
    %c0_i32_1 = arith.constant 0 : i32
    return %c0_i32, %c0_i32_0 : i32, i32
  }
  func.func @transform_9(%arg0: i32) -> (i32, i32, i32) {
    %c0_i32 = arith.constant 0 : i32
    %c0_i32_0 = arith.constant 0 : i32
    %c0_i32_1 = arith.constant 0 : i32
    return %arg0, %c0_i32, %c0_i32_0 : i32, i32, i32
  }
}

</mosaic_0001>

<llo_original>
// kernel: tpu_custom_call.1
$region0: #{tpu_custom_call.1}
  #allocation0 [shape = 'u32[]', space=smem, size = 0x4, offset = 0x4, fixed_abs, tag = 'smem constant byte address 0x4 - core index']
  #allocation1 [shape = 'u32[72,128]{1,0:T(1,128)}', space=vmem, size = 0x9000, scoped, tag = 'internal scratch']
  %s0 = inlined_call_operand.vmem [shape: f32[2,8,32], index: 0, kind: input, shape index: {}]
  %s1 = inlined_call_operand.hbm [shape: bf16[32,96], index: 1, kind: input, shape index: {}]
  %s2 = inlined_call_operand.hbm [shape: f32[1,96], index: 2, kind: input, shape index: {}]
  %s3 = inlined_call_operand.vmem [shape: f32[3,96], index: 3, kind: input, shape index: {}]
  %s4 = inlined_call_operand.hbm [shape: f32[1,96], index: 4, kind: input, shape index: {}]
  %s5 = inlined_call_operand.vmem [shape: f32[8,4], index: 5, kind: input, shape index: {}]
  %s6 = inlined_call_operand.vmem [shape: f32[8,4], index: 6, kind: input, shape index: {}]
  %s7 = inlined_call_operand.hbm [shape: bf16[32,32], index: 7, kind: input, shape index: {}]
  %s8 = inlined_call_operand.vmem [shape: f32[1,32], index: 8, kind: input, shape index: {}]
  %s9 = inlined_call_operand.hbm [shape: f32[2,8,32], index: 9, kind: output, shape index: {}]
  %s10 = sld [smem:[#allocation0]]
  $region85: #{tpu_custom_call.1} parent=0
    _
  %s12 = ssub.s32 1, %s10
  %s13 = scalar_select 0, %s12, %s10
  $region1: #{tpu_custom_call.1} parent=0
    #allocation2 [shape = 'u8[8192]{0}', space=vmem, size = 0x2000, scoped, tag = 'input window, operand 1, single buffered']
    #allocation3 [shape = 's32[2]{0}', space=sflag, size = 0x8, scoped, tag = 'scoped memory for tpu_custom_call.1']
    #allocation4 [shape = 's32[2]{0}', space=sflag, size = 0x8, scoped, tag = 'scoped memory for tpu_custom_call.1']
    #allocation5 [shape = 'u8[512]{0}', space=vmem, size = 0x400, scoped, tag = 'input window, operand 2, single buffered']
    #allocation6 [shape = 's32[1]{0}', space=sflag, size = 0x4, scoped, tag = 'scoped memory for tpu_custom_call.1']
    #allocation7 [shape = 'u8[512]{0}', space=vmem, size = 0x400, scoped, tag = 'input window, operand 4, single buffered']
    #allocation8 [shape = 'u8[8192]{0}', space=vmem, size = 0x2000, scoped, tag = 'input window, operand 7, single buffered']
    #allocation9 [shape = 's32[1]{0}', space=sflag, size = 0x4, scoped, tag = 'scoped memory for tpu_custom_call.1']
    #allocation10 [shape = 'u8[8192]{0}', space=vmem, size = 0x2000, scoped, tag = 'output window, operand 0']
    %14 = vsyncpa [#allocation3], 0
    %15 = vsyncpa [#allocation6], 0
    %16 = vsyncpa [#allocation9], 0
    %17 = vsyncpa [#allocation4], 0
    %s18 = scalar_lea.sflag [#allocation4], 1
    %19 = vsyncpa %s18, 0
    loop: start=0, step=1, limit=4
    $region2: #{tpu_custom_call.1} parent=1 // loop_pre_header
      _
    $region3: #{tpu_custom_call.1} parent=1 // loop_header
      %s21 = sphi 0, %s25
      %p22 = scmp.ge.s32.totalorder %s21, 4
      %s31 = sphi 0, %s33
      %s34 = sphi 0, %s31
      %s35 = sphi 0, %s34
      %s51 = sphi 0, %s35
      %s55 = sphi 0, %s55
      %s57 = sphi 0, %s55
      %s58 = sphi 0, %s57
      %s72 = sphi 0, %s58
      %s76 = sphi 0, %s76
      %s78 = sphi 0, %s76
      %s79 = sphi 0, %s78
      %s93 = sphi 0, %s79
      %s97 = sphi 0, %s97
      %s99 = sphi 0, %s97
      %s100 = sphi 0, %s99
      %s114 = sphi 0, %s100
      %s118 = sphi 0, %s118
      %s120 = sphi 0, %s118
      %s121 = sphi 0, %s120
      %s135 = sphi 0, %s121
      %s139 = sphi 0, %s139
      %s141 = sphi 0, %s139
      %s142 = sphi 0, %s141
      %s156 = sphi 0, %s142
      %s160 = sphi 0, %s160
      %s162 = sphi 0, %s160
      %s163 = sphi 0, %s162
      %s177 = sphi 0, %s163
      %s181 = sphi 0, %s181
      %s183 = sphi 0, %s181
      %s184 = sphi 0, %s183
      %s198 = sphi 0, %s184
      %s202 = sphi 0, %s202
      %s204 = sphi 0, %s202
      %s205 = sphi 0, %s204
      %s219 = sphi 0, %s205
      %s225 = sphi 0, %s227
      %s228 = sphi 0, %s225
      %s229 = sphi 0, %s228
      %s245 = sphi 0, %s229
    $region4: #{tpu_custom_call.1} parent=1 // loop_header_branch
      %24 = sbr.rel (%p22) target = $region8
    $region5: #{tpu_custom_call.1} parent=1 // loop_body
      %s26 = ssub.s32 %s21, 1
      %s27 = ssub.s32 %s21, 2
      %s28 = sadd.s32 %s21, 1
      %s29 = ssub.s32 %s21, %s28
      %p30 = scmp.eq.s32.totalorder %s29, 0
      %s32 = sadd.s32 %s31, 1
      %s33 = scalar_select %p30, %s31, %s32
      %p36 = pneg %p30
      %p37 = scmp.eq.s32.totalorder %s21, 1
      %p38 = por %p36, %p37
      %p39 = scmp.ne.s32.totalorder %s31, %s34
      %p40 = scmp.eq.s32.totalorder %s21, 0
      %p41 = por %p39, %p40
      %p42 = scmp.ne.s32.totalorder %s31, %s34
      %p43 = scmp.eq.s32.totalorder %s26, 1
      %p44 = por %p42, %p43
      %p45 = scmp.ne.s32.totalorder %s34, %s35
      %p46 = scmp.eq.s32.totalorder %s26, 0
      %p47 = por %p45, %p46
      %p48 = scmp.ne.s32.totalorder %s34, %s35
      %p49 = scmp.eq.s32.totalorder %s27, 1
      %p50 = por %p48, %p49
      %p52 = scmp.ne.s32.totalorder %s35, %s51
      %p53 = scmp.eq.s32.totalorder %s27, 0
      %p54 = por %p52, %p53
      %s56 = sadd.s32 %s55, 1
      %p59 = scmp.eq.s32.totalorder %s21, 1
      %p60 = scmp.ne.s32.totalorder %s55, %s57
      %p61 = scmp.eq.s32.totalorder %s21, 0
      %p62 = por %p60, %p61
      %p63 = scmp.ne.s32.totalorder %s55, %s57
      %p64 = scmp.eq.s32.totalorder %s26, 1
      %p65 = por %p63, %p64
      %p66 = scmp.ne.s32.totalorder %s57, %s58
      %p67 = scmp.eq.s32.totalorder %s26, 0
      %p68 = por %p66, %p67
      %p69 = scmp.ne.s32.totalorder %s57, %s58
      %p70 = scmp.eq.s32.totalorder %s27, 1
      %p71 = por %p69, %p70
      %p73 = scmp.ne.s32.totalorder %s58, %s72
      %p74 = scmp.eq.s32.totalorder %s27, 0
      %p75 = por %p73, %p74
      %s77 = sadd.s32 %s76, 1
      %p80 = scmp.eq.s32.totalorder %s21, 1
      %p81 = scmp.ne.s32.totalorder %s76, %s78
      %p82 = scmp.eq.s32.totalorder %s21, 0
      %p83 = por %p81, %p82
      %p84 = scmp.ne.s32.totalorder %s76, %s78
      %p85 = scmp.eq.s32.totalorder %s26, 1
      %p86 = por %p84, %p85
      %p87 = scmp.ne.s32.totalorder %s78, %s79
      %p88 = scmp.eq.s32.totalorder %s26, 0
      %p89 = por %p87, %p88
      %p90 = scmp.ne.s32.totalorder %s78, %s79
      %p91 = scmp.eq.s32.totalorder %s27, 1
      %p92 = por %p90, %p91
      %p94 = scmp.ne.s32.totalorder %s79, %s93
      %p95 = scmp.eq.s32.totalorder %s27, 0
      %p96 = por %p94, %p95
      %s98 = sadd.s32 %s97, 1
      %p101 = scmp.eq.s32.totalorder %s21, 1
      %p102 = scmp.ne.s32.totalorder %s97, %s99
      %p103 = scmp.eq.s32.totalorder %s21, 0
      %p104 = por %p102, %p103
      %p105 = scmp.ne.s32.totalorder %s97, %s99
      %p106 = scmp.eq.s32.totalorder %s26, 1
      %p107 = por %p105, %p106
      %p108 = scmp.ne.s32.totalorder %s99, %s100
      %p109 = scmp.eq.s32.totalorder %s26, 0
      %p110 = por %p108, %p109
      %p111 = scmp.ne.s32.totalorder %s99, %s100
      %p112 = scmp.eq.s32.totalorder %s27, 1
      %p113 = por %p111, %p112
      %p115 = scmp.ne.s32.totalorder %s100, %s114
      %p116 = scmp.eq.s32.totalorder %s27, 0
      %p117 = por %p115, %p116
      %s119 = sadd.s32 %s118, 1
      %p122 = scmp.eq.s32.totalorder %s21, 1
      %p123 = scmp.ne.s32.totalorder %s118, %s120
      %p124 = scmp.eq.s32.totalorder %s21, 0
      %p125 = por %p123, %p124
      %p126 = scmp.ne.s32.totalorder %s118, %s120
      %p127 = scmp.eq.s32.totalorder %s26, 1
      %p128 = por %p126, %p127
      %p129 = scmp.ne.s32.totalorder %s120, %s121
      %p130 = scmp.eq.s32.totalorder %s26, 0
      %p131 = por %p129, %p130
      %p132 = scmp.ne.s32.totalorder %s120, %s121
      %p133 = scmp.eq.s32.totalorder %s27, 1
      %p134 = por %p132, %p133
      %p136 = scmp.ne.s32.totalorder %s121, %s135
      %p137 = scmp.eq.s32.totalorder %s27, 0
      %p138 = por %p136, %p137
      %s140 = sadd.s32 %s139, 1
      %p143 = scmp.eq.s32.totalorder %s21, 1
      %p144 = scmp.ne.s32.totalorder %s139, %s141
      %p145 = scmp.eq.s32.totalorder %s21, 0
      %p146 = por %p144, %p145
      %p147 = scmp.ne.s32.totalorder %s139, %s141
      %p148 = scmp.eq.s32.totalorder %s26, 1
      %p149 = por %p147, %p148
      %p150 = scmp.ne.s32.totalorder %s141, %s142
      %p151 = scmp.eq.s32.totalorder %s26, 0
      %p152 = por %p150, %p151
      %p153 = scmp.ne.s32.totalorder %s141, %s142
      %p154 = scmp.eq.s32.totalorder %s27, 1
      %p155 = por %p153, %p154
      %p157 = scmp.ne.s32.totalorder %s142, %s156
      %p158 = scmp.eq.s32.totalorder %s27, 0
      %p159 = por %p157, %p158
      %s161 = sadd.s32 %s160, 1
      %p164 = scmp.eq.s32.totalorder %s21, 1
      %p165 = scmp.ne.s32.totalorder %s160, %s162
      %p166 = scmp.eq.s32.totalorder %s21, 0
      %p167 = por %p165, %p166
      %p168 = scmp.ne.s32.totalorder %s160, %s162
      %p169 = scmp.eq.s32.totalorder %s26, 1
      %p170 = por %p168, %p169
      %p171 = scmp.ne.s32.totalorder %s162, %s163
      %p172 = scmp.eq.s32.totalorder %s26, 0
      %p173 = por %p171, %p172
      %p174 = scmp.ne.s32.totalorder %s162, %s163
      %p175 = scmp.eq.s32.totalorder %s27, 1
      %p176 = por %p174, %p175
      %p178 = scmp.ne.s32.totalorder %s163, %s177
      %p179 = scmp.eq.s32.totalorder %s27, 0
      %p180 = por %p178, %p179
      %s182 = sadd.s32 %s181, 1
      %p185 = scmp.eq.s32.totalorder %s21, 1
      %p186 = scmp.ne.s32.totalorder %s181, %s183
      %p187 = scmp.eq.s32.totalorder %s21, 0
      %p188 = por %p186, %p187
      %p189 = scmp.ne.s32.totalorder %s181, %s183
      %p190 = scmp.eq.s32.totalorder %s26, 1
      %p191 = por %p189, %p190
      %p192 = scmp.ne.s32.totalorder %s183, %s184
      %p193 = scmp.eq.s32.totalorder %s26, 0
      %p194 = por %p192, %p193
      %p195 = scmp.ne.s32.totalorder %s183, %s184
      %p196 = scmp.eq.s32.totalorder %s27, 1
      %p197 = por %p195, %p196
      %p199 = scmp.ne.s32.totalorder %s184, %s198
      %p200 = scmp.eq.s32.totalorder %s27, 0
      %p201 = por %p199, %p200
      %s203 = sadd.s32 %s202, 1
      %p206 = scmp.eq.s32.totalorder %s21, 1
      %p207 = scmp.ne.s32.totalorder %s202, %s204
      %p208 = scmp.eq.s32.totalorder %s21, 0
      %p209 = por %p207, %p208
      %p210 = scmp.ne.s32.totalorder %s202, %s204
      %p211 = scmp.eq.s32.totalorder %s26, 1
      %p212 = por %p210, %p211
      %p213 = scmp.ne.s32.totalorder %s204, %s205
      %p214 = scmp.eq.s32.totalorder %s26, 0
      %p215 = por %p213, %p214
      %p216 = scmp.ne.s32.totalorder %s204, %s205
      %p217 = scmp.eq.s32.totalorder %s27, 1
      %p218 = por %p216, %p217
      %p220 = scmp.ne.s32.totalorder %s205, %s219
      %p221 = scmp.eq.s32.totalorder %s27, 0
      %p222 = por %p220, %p221
      %s223 = ssub.s32 %s21, %s28
      %p224 = scmp.eq.s32.totalorder %s223, 0
      %s226 = sadd.s32 %s225, 1
      %s227 = scalar_select %p224, %s225, %s226
      %p230 = pneg %p224
      %p231 = scmp.eq.s32.totalorder %s21, 1
      %p232 = por %p230, %p231
      %p233 = scmp.ne.s32.totalorder %s225, %s228
      %p234 = scmp.eq.s32.totalorder %s21, 0
      %p235 = por %p233, %p234
      %p236 = scmp.ne.s32.totalorder %s225, %s228
      %p237 = scmp.eq.s32.totalorder %s26, 1
      %p238 = por %p236, %p237
      %p239 = scmp.ne.s32.totalorder %s228, %s229
      %p240 = scmp.eq.s32.totalorder %s26, 0
      %p241 = por %p239, %p240
      %p242 = scmp.ne.s32.totalorder %s228, %s229
      %p243 = scmp.eq.s32.totalorder %s27, 1
      %p244 = por %p242, %p243
      %p246 = scmp.ne.s32.totalorder %s229, %s245
      %p247 = scmp.eq.s32.totalorder %s27, 0
      %p248 = por %p246, %p247
      %p249 = scmp.le.s32.totalorder 1, %s21
      %p250 = scmp.lt.s32.totalorder %s21, 3
      %p251 = pnand %p249, %p250
      %p252 = pneg %p251
      // Predicated region
      $region9: #{tpu_custom_call.1} parent=5 // pred_check
        _
      $region10: #{tpu_custom_call.1} parent=5 // pred_check_branch
        %254 = sbr.rel (%p251) target = $region12
      $region11: #{tpu_custom_call.1} parent=5 // pred_region
        %s255 = ssub.s32 %s21, 1
        // Predicated region
        $region13: #{tpu_custom_call.1} parent=11 // pred_check
          %p256 = pneg %p68
        $region14: #{tpu_custom_call.1} parent=11 // pred_check_branch
          %258 = sbr.rel (%p256) target = $region16
        $region15: #{tpu_custom_call.1} parent=11 // pred_region
          %260 = vsyncadd [#allocation3], 0
          %s261 = sshll.u32 %s1, 4
          %s262 = int_to_ptr.hbm [resolvable:$true] %s261
          %s263 = sshll.u32 [#allocation2], 4
          %s264 = int_to_ptr.vmem [resolvable:$true] %s263
          %269 = dma.hbm_to_vmem [thread:$0]  %s262, 256, %s264, [#allocation3], 64, 64, 4
        $region16: #{tpu_custom_call.1} parent=11 // pred_fallthru
          _
        // Predicated region
        $region17: #{tpu_custom_call.1} parent=11 // pred_check
          %p270 = pneg %p89
        $region18: #{tpu_custom_call.1} parent=11 // pred_check_branch
          %272 = sbr.rel (%p270) target = $region20
        $region19: #{tpu_custom_call.1} parent=11 // pred_region
          %274 = vsyncadd [#allocation6], 0
          %s276 = sshll.u32 %s2, 4
          %s277 = int_to_ptr.hbm [resolvable:$true] %s276
          %s278 = sshll.u32 [#allocation5], 4
          %s279 = int_to_ptr.vmem [resolvable:$true] %s278
          %281 = dma.hbm_to_vmem [thread:$0]  %s277, 16, %s279, [#allocation6]
        $region20: #{tpu_custom_call.1} parent=11 // pred_fallthru
          _
        // Predicated region
        $region21: #{tpu_custom_call.1} parent=11 // pred_check
          %p282 = pneg %p110
        $region22: #{tpu_custom_call.1} parent=11 // pred_check_branch
          %284 = sbr.rel (%p282) target = $region24
        $region23: #{tpu_custom_call.1} parent=11 // pred_region
          _
        $region24: #{tpu_custom_call.1} parent=11 // pred_fallthru
          _
        // Predicated region
        $region25: #{tpu_custom_call.1} parent=11 // pred_check
          %p285 = pneg %p131
        $region26: #{tpu_custom_call.1} parent=11 // pred_check_branch
          %287 = sbr.rel (%p285) target = $region28
        $region27: #{tpu_custom_call.1} parent=11 // pred_region
          %289 = vsyncadd [#allocation6], 0
          %s291 = sshll.u32 %s4, 4
          %s292 = int_to_ptr.hbm [resolvable:$true] %s291
          %s293 = sshll.u32 [#allocation7], 4
          %s294 = int_to_ptr.vmem [resolvable:$true] %s293
          %296 = dma.hbm_to_vmem [thread:$0]  %s292, 16, %s294, [#allocation6]
        $region28: #{tpu_custom_call.1} parent=11 // pred_fallthru
          _
        // Predicated region
        $region29: #{tpu_custom_call.1} parent=11 // pred_check
          %p297 = pneg %p152
        $region30: #{tpu_custom_call.1} parent=11 // pred_check_branch
          %299 = sbr.rel (%p297) target = $region32
        $region31: #{tpu_custom_call.1} parent=11 // pred_region
          _
        $region32: #{tpu_custom_call.1} parent=11 // pred_fallthru
          _
        // Predicated region
        $region33: #{tpu_custom_call.1} parent=11 // pred_check
          %p300 = pneg %p173
        $region34: #{tpu_custom_call.1} parent=11 // pred_check_branch
          %302 = sbr.rel (%p300) target = $region36
        $region35: #{tpu_custom_call.1} parent=11 // pred_region
          _
        $region36: #{tpu_custom_call.1} parent=11 // pred_fallthru
          _
        // Predicated region
        $region37: #{tpu_custom_call.1} parent=11 // pred_check
          %p303 = pneg %p194
        $region38: #{tpu_custom_call.1} parent=11 // pred_check_branch
          %305 = sbr.rel (%p303) target = $region40
        $region39: #{tpu_custom_call.1} parent=11 // pred_region
          %307 = vsyncadd [#allocation9], 0
          %s308 = sshll.u32 %s7, 4
          %s309 = int_to_ptr.hbm [resolvable:$true] %s308
          %s310 = sshll.u32 [#allocation8], 4
          %s311 = int_to_ptr.vmem [resolvable:$true] %s310
          %316 = dma.hbm_to_vmem [thread:$0]  %s309, 256, %s311, [#allocation9], 64, 64, 4
        $region40: #{tpu_custom_call.1} parent=11 // pred_fallthru
          _
        // Predicated region
        $region41: #{tpu_custom_call.1} parent=11 // pred_check
          %p317 = pneg %p215
        $region42: #{tpu_custom_call.1} parent=11 // pred_check_branch
          %319 = sbr.rel (%p317) target = $region44
        $region43: #{tpu_custom_call.1} parent=11 // pred_region
          _
        $region44: #{tpu_custom_call.1} parent=11 // pred_fallthru
          _
      $region12: #{tpu_custom_call.1} parent=5 // pred_fallthru
        _
      %p320 = scmp.lt.s32.totalorder %s21, 2
      // Predicated region
      $region45: #{tpu_custom_call.1} parent=5 // pred_check
        %p321 = pneg %p320
      $region46: #{tpu_custom_call.1} parent=5 // pred_check_branch
        %323 = sbr.rel (%p321) target = $region48
      $region47: #{tpu_custom_call.1} parent=5 // pred_region
        // Predicated region
        $region49: #{tpu_custom_call.1} parent=47 // pred_check
          %p324 = pneg %p41
        $region50: #{tpu_custom_call.1} parent=47 // pred_check_branch
          %326 = sbr.rel (%p324) target = $region52
        $region51: #{tpu_custom_call.1} parent=47 // pred_region
          %p327 = scmp.lt.s32.totalorder %s21, 1
          %s328 = scalar_select %p327, %s21, 1
          %s329 = smul.addr %s328, 8
          %s330 = scalar_lea.vmem %s0, %s329
        $region52: #{tpu_custom_call.1} parent=47 // pred_fallthru
          _
      $region48: #{tpu_custom_call.1} parent=5 // pred_fallthru
        _
      %p331 = scmp.le.s32.totalorder 1, %s21
      %p332 = scmp.lt.s32.totalorder %s21, 3
      %p333 = pnand %p331, %p332
      %p334 = pneg %p333
      // Predicated region
      $region53: #{tpu_custom_call.1} parent=5 // pred_check
        _
      $region54: #{tpu_custom_call.1} parent=5 // pred_check_branch
        %336 = sbr.rel (%p333) target = $region56
      $region55: #{tpu_custom_call.1} parent=5 // pred_region
        %s337 = ssub.s32 %s21, 1
        // Predicated region
        $region57: #{tpu_custom_call.1} parent=55 // pred_check
          %p338 = pneg %p68
        $region58: #{tpu_custom_call.1} parent=55 // pred_check_branch
          %340 = sbr.rel (%p338) target = $region60
        $region59: #{tpu_custom_call.1} parent=55 // pred_region
          %342 = dma.done [#allocation3], 256
        $region60: #{tpu_custom_call.1} parent=55 // pred_fallthru
          _
        // Predicated region
        $region61: #{tpu_custom_call.1} parent=55 // pred_check
          %p343 = pneg %p89
        $region62: #{tpu_custom_call.1} parent=55 // pred_check_branch
          %345 = sbr.rel (%p343) target = $region64
        $region63: #{tpu_custom_call.1} parent=55 // pred_region
          %347 = dma.done [#allocation6], 16
        $region64: #{tpu_custom_call.1} parent=55 // pred_fallthru
          _
        // Predicated region
        $region65: #{tpu_custom_call.1} parent=55 // pred_check
          %p348 = pneg %p131
        $region66: #{tpu_custom_call.1} parent=55 // pred_check_branch
          %350 = sbr.rel (%p348) target = $region68
        $region67: #{tpu_custom_call.1} parent=55 // pred_region
          %352 = dma.done [#allocation6], 16
        $region68: #{tpu_custom_call.1} parent=55 // pred_fallthru
          _
        // Predicated region
        $region69: #{tpu_custom_call.1} parent=55 // pred_check
          %p353 = pneg %p194
        $region70: #{tpu_custom_call.1} parent=55 // pred_check_branch
          %355 = sbr.rel (%p353) target = $region72
        $region71: #{tpu_custom_call.1} parent=55 // pred_region
          %357 = dma.done [#allocation9], 256
        $region72: #{tpu_custom_call.1} parent=55 // pred_fallthru
          _
        %p358 = scmp.lt.s32.totalorder %s26, 1
        %s359 = scalar_select %p358, %s26, 1
        %s360 = smul.addr %s359, 8
        %s361 = scalar_lea.vmem %s0, %s360
        %p362 = pneg %p47
        %p363 = pneg %p44
        %p364 = pneg %p68
        %p365 = pneg %p65
        %p366 = pneg %p89
        %p367 = pneg %p86
        %p368 = pneg %p110
        %p369 = pneg %p107
        %p370 = pneg %p131
        %p371 = pneg %p128
        %p372 = pneg %p152
        %p373 = pneg %p149
        %p374 = pneg %p173
        %p375 = pneg %p170
        %p376 = pneg %p194
        %p377 = pneg %p191
        %p378 = pneg %p215
        %p379 = pneg %p212
        %p380 = pneg %p241
        %p381 = pneg %p238
        %s382 = sand.u32 %s228, 1
        %s383 = scalar_lea.sflag [#allocation4], %s382
        %s384 = sand.u32 %s228, 1
        %s385 = smul.addr %s384, 8
        %s386 = scalar_lea.vmem [#allocation10], %s385
        %p387 = scmp.lt.s32.totalorder %s26, 1
        %s388 = scalar_select %p387, %s26, 1
        %s389 = smul.addr %s388, 8
        %s390 = scalar_lea.vmem %s0, %s389
        %v392 = vld [vmem:[%s390] sm:$0xff]
        %v393 = vpack.c.bf16 %v392, %v392
        %v394 = vld [vmem:[#allocation2] sm:$0xf]
        %v395 = vld [vmem:[#allocation2 + $0x4] sm:$0xf]
        %v396 = vld [vmem:[#allocation2 + $0x8] sm:$0xf]
        %v397 = vld [vmem:[#allocation2 + $0xc] sm:$0xf]
        %v398 = vld [vmem:[#allocation5] sm:$0x1]
        %v400 = vperm.slane %v398, 0
        %v406 = vunpack.c.l.b16 %v394
        %v407 = vunpack.c.l.b16 %v395
        %v408 = vunpack.c.l.b16 %v396
        %v409 = vunpack.c.l.b16 %v397
        %v410 = vpack.c.b16 %v407, %v406
        %v411 = vpack.c.b16 %v409, %v408
        %vm414 = vcmask 261120
        %v416 = vsel %vm414, %v393, 0
        %418 = vmatpush.bf16.msra.mxu0 0
        %419 = vmatpush.bf16.msra.mxu0 0
        %420 = vmatpush.bf16.msra.mxu0 0
        %421 = vmatpush.bf16.msra.mxu0 0
        %422 = vmatpush.bf16.msra.mxu0 0
        %423 = vmatpush.bf16.msra.mxu0 0
        %424 = vmatpush.bf16.msra.mxu0 %v411
        %425 = vmatpush.bf16.msra.mxu0 %v410
        %426 = vmatmul.bf16.gmra.mxu0 %v416
        %v427 = vpop.f32.mrf.mxu0
        %v428 = vadd.f32 %v400, %v427
        %v429 = vpop.f32.mrf.mxu0
        %430 = vdwg.mxu0
        %v431 = vld [vmem:[%s3] sm:$0x7]
        %v433 = vrot.slane %v428, 7
        %vm435 = vcmask 1040384
        %v436 = vsel %vm435, 0.0, %v433
        %v437 = vrot.slane %v428, 6
        %vm439 = vcmask 1041408
        %v440 = vsel %vm439, 0.0, %v437
        %v441 = vperm.slane %v431, 2
        %v442 = vmul.f32 %v428, %v441
        %v443 = vperm.slane %v431, 1
        %v444 = vmul.f32 %v436, %v443
        %v445 = vadd.f32 %v442, %v444
        %v446 = vperm.slane %v431, 0
        %v447 = vmul.f32 %v440, %v446
        %v448 = vadd.f32 %v445, %v447
        %v449 = vld [vmem:[#allocation7] sm:$0x1]
        %v451 = vperm.slane %v449, 0
        %v453 = vadd.f32 %v448, %v451
        %v454 = vld [vmem:[%s5] sm:$0xff]
        %v455 = vld [vmem:[%s6] sm:$0xff]
        %v456 = vmul.f32 %v453, %v454
        %458 = vrot.lane.b32.xlu0 %v455, 4
        %v459 = vpop.permute.xlu0 %458
        %v461 = vmul.f32 %v453, %v459
        %463 = vrot.lane.b32.xlu0 %v461, 124
        %v464 = vpop.permute.xlu0 %463
        %v466 = vsub.f32 %v456, %v464
        %468 = vrot.lane.b32.xlu0 %v454, 4
        %v469 = vpop.permute.xlu0 %468
        %v471 = vmul.f32 %v453, %v469
        %v472 = vmul.f32 %v453, %v455
        %474 = vrot.lane.b32.xlu0 %v472, 4
        %v475 = vpop.permute.xlu0 %474
        %v477 = vadd.f32 %v471, %v475
        %vm478 = vcmask 31744
        %v479 = vsel %vm478, %v466, %v477
        %v480 = vmul.f32 %v479, 0.35355338
        %v481 = vpack.c.bf16 %v480, %v480
        %482 = vrot.lane.b32.xlu0 %v454, 32
        %v483 = vpop.permute.xlu0 %482
        %v485 = vmul.f32 %v453, %v483
        %486 = vrot.lane.b32.xlu0 %v455, 36
        %v487 = vpop.permute.xlu0 %486
        %v489 = vmul.f32 %v453, %v487
        %491 = vrot.lane.b32.xlu0 %v489, 124
        %v492 = vpop.permute.xlu0 %491
        %v494 = vsub.f32 %v485, %v492
        %495 = vrot.lane.b32.xlu0 %v454, 36
        %v496 = vpop.permute.xlu0 %495
        %v498 = vmul.f32 %v453, %v496
        %499 = vrot.lane.b32.xlu0 %v455, 32
        %v500 = vpop.permute.xlu0 %499
        %v502 = vmul.f32 %v453, %v500
        %504 = vrot.lane.b32.xlu0 %v502, 4
        %v505 = vpop.permute.xlu0 %504
        %v507 = vadd.f32 %v498, %v505
        %509 = vrot.lane.b32.xlu0 %v494, 96
        %v510 = vpop.permute.xlu0 %509
        %513 = vrot.lane.b32.xlu0 %v507, 96
        %v514 = vpop.permute.xlu0 %513
        %v516 = vsel %vm478, %v510, %v514
        %v517 = vpack.c.bf16 %v516, %v516
        %v518 = vpack.c.bf16 %v453, %v453
        %vm519 = vcmask 64512
        %v521 = vsel %vm519, %v481, 0
        %v524 = vsel %vm519, %v517, 0
        %526 = vmatpush.bf16.xpose.msra.mxu0 0
        %527 = vmatpush.bf16.xpose.msra.mxu0 0
        %528 = vmatpush.bf16.xpose.msra.mxu0 0
        %529 = vmatpush.bf16.xpose.msra.mxu0 0
        %530 = vmatpush.bf16.xpose.msra.mxu0 0
        %531 = vmatpush.bf16.xpose.msra.mxu0 0
        %532 = vmatpush.bf16.xpose.msra.mxu0 0
        %533 = vmatpush.bf16.xpose.msra.mxu0 %v524
        %534 = vmatmul.bf16.gmra.mxu0 %v521
        %v535 = vpop.f32.mrf.mxu0
        %v536 = vadd.f32 0.0, %v535
        %v537 = vpop.f32.mrf.mxu0
        %538 = vdwg.mxu0
        %v539 = vsel %vm519, %v536, -inf
        %540 = vmax.xlane.f32.xlu0 %v539
        %v541 = vpop.xlane.xlu0 %540
        %v542 = vsub.f32 %v536, %v541
        %v543 = vmul.f32 %v542, 1.442695
        %v544 = vpow.pop %v543
        %v545 = vsel %vm519, %v544, 0.0
        %546 = vadd.xlane.f32.xlu0 %v545
        %v547 = vpop.xlane.xlu0 %546
        %v548 = vpack.c.bf16 %v544, %v544
        %v550 = vunpack.c.l.b16 %v518
        %v551 = vpack.c.b16 %v550, %v550
        %552 = vrot.lane.b32.xlu0 %v551, 64
        %v553 = vpop.permute.xlu0 %552
        %v555 = vsel %vm519, %v548, 0
        %vm557 = vcmask 1043456
        %v559 = vsel %vm557, %v553, 0
        %561 = vmatpush.bf16.msra.mxu0 0
        %562 = vmatpush.bf16.msra.mxu0 0
        %563 = vmatpush.bf16.msra.mxu0 0
        %564 = vmatpush.bf16.msra.mxu0 0
        %565 = vmatpush.bf16.msra.mxu0 0
        %566 = vmatpush.bf16.msra.mxu0 0
        %567 = vmatpush.bf16.msra.mxu0 0
        %568 = vmatpush.bf16.msra.mxu0 %v559
        %569 = vmatmul.bf16.gmra.mxu0 %v555
        %v570 = vpop.f32.mrf.mxu0
        %v571 = vadd.f32 0.0, %v570
        %v572 = vpop.f32.mrf.mxu0
        %573 = vdwg.mxu0
        %v574 = vrcp.pop %v547
        %v575 = vmul.f32 %v571, %v574
        %576 = vrot.lane.b32.xlu0 %v454, 8
        %v577 = vpop.permute.xlu0 %576
        %v579 = vmul.f32 %v453, %v577
        %580 = vrot.lane.b32.xlu0 %v455, 12
        %v581 = vpop.permute.xlu0 %580
        %v583 = vmul.f32 %v453, %v581
        %585 = vrot.lane.b32.xlu0 %v583, 124
        %v586 = vpop.permute.xlu0 %585
        %v588 = vsub.f32 %v579, %v586
        %589 = vrot.lane.b32.xlu0 %v454, 12
        %v590 = vpop.permute.xlu0 %589
        %v592 = vmul.f32 %v453, %v590
        %593 = vrot.lane.b32.xlu0 %v455, 8
        %v594 = vpop.permute.xlu0 %593
        %v596 = vmul.f32 %v453, %v594
        %598 = vrot.lane.b32.xlu0 %v596, 4
        %v599 = vpop.permute.xlu0 %598
        %v601 = vadd.f32 %v592, %v599
        %603 = vrot.lane.b32.xlu0 %v588, 120
        %v604 = vpop.permute.xlu0 %603
        %607 = vrot.lane.b32.xlu0 %v601, 120
        %v608 = vpop.permute.xlu0 %607
        %v610 = vsel %vm478, %v604, %v608
        %v611 = vmul.f32 %v610, 0.35355338
        %v612 = vpack.c.bf16 %v611, %v611
        %613 = vrot.lane.b32.xlu0 %v454, 40
        %v614 = vpop.permute.xlu0 %613
        %v616 = vmul.f32 %v453, %v614
        %617 = vrot.lane.b32.xlu0 %v455, 44
        %v618 = vpop.permute.xlu0 %617
        %v620 = vmul.f32 %v453, %v618
        %622 = vrot.lane.b32.xlu0 %v620, 124
        %v623 = vpop.permute.xlu0 %622
        %v625 = vsub.f32 %v616, %v623
        %626 = vrot.lane.b32.xlu0 %v454, 44
        %v627 = vpop.permute.xlu0 %626
        %v629 = vmul.f32 %v453, %v627
        %630 = vrot.lane.b32.xlu0 %v455, 40
        %v631 = vpop.permute.xlu0 %630
        %v633 = vmul.f32 %v453, %v631
        %635 = vrot.lane.b32.xlu0 %v633, 4
        %v636 = vpop.permute.xlu0 %635
        %v638 = vadd.f32 %v629, %v636
        %640 = vrot.lane.b32.xlu0 %v625, 88
        %v641 = vpop.permute.xlu0 %640
        %644 = vrot.lane.b32.xlu0 %v638, 88
        %v645 = vpop.permute.xlu0 %644
        %v647 = vsel %vm478, %v641, %v645
        %v648 = vpack.c.bf16 %v647, %v647
        %v650 = vsel %vm519, %v612, 0
        %v653 = vsel %vm519, %v648, 0
        %655 = vmatpush.bf16.xpose.msra.mxu0 0
        %656 = vmatpush.bf16.xpose.msra.mxu0 0
        %657 = vmatpush.bf16.xpose.msra.mxu0 0
        %658 = vmatpush.bf16.xpose.msra.mxu0 0
        %659 = vmatpush.bf16.xpose.msra.mxu0 0
        %660 = vmatpush.bf16.xpose.msra.mxu0 0
        %661 = vmatpush.bf16.xpose.msra.mxu0 0
        %662 = vmatpush.bf16.xpose.msra.mxu0 %v653
        %663 = vmatmul.bf16.gmra.mxu0 %v650
        %v664 = vpop.f32.mrf.mxu0
        %v665 = vadd.f32 0.0, %v664
        %v666 = vpop.f32.mrf.mxu0
        %667 = vdwg.mxu0
        %v668 = vsel %vm519, %v665, -inf
        %669 = vmax.xlane.f32.xlu0 %v668
        %v670 = vpop.xlane.xlu0 %669
        %v671 = vsub.f32 %v665, %v670
        %v672 = vmul.f32 %v671, 1.442695
        %v673 = vpow.pop %v672
        %v674 = vsel %vm519, %v673, 0.0
        %675 = vadd.xlane.f32.xlu0 %v674
        %v676 = vpop.xlane.xlu0 %675
        %v677 = vpack.c.bf16 %v673, %v673
        %678 = vrot.lane.b32.xlu0 %v551, 56
        %v679 = vpop.permute.xlu0 %678
        %v681 = vsel %vm519, %v677, 0
        %v684 = vsel %vm557, %v679, 0
        %686 = vmatpush.bf16.msra.mxu0 0
        %687 = vmatpush.bf16.msra.mxu0 0
        %688 = vmatpush.bf16.msra.mxu0 0
        %689 = vmatpush.bf16.msra.mxu0 0
        %690 = vmatpush.bf16.msra.mxu0 0
        %691 = vmatpush.bf16.msra.mxu0 0
        %692 = vmatpush.bf16.msra.mxu0 0
        %693 = vmatpush.bf16.msra.mxu0 %v684
        %694 = vmatmul.bf16.gmra.mxu0 %v681
        %v695 = vpop.f32.mrf.mxu0
        %v696 = vadd.f32 0.0, %v695
        %v697 = vpop.f32.mrf.mxu0
        %698 = vdwg.mxu0
        %v699 = vrcp.pop %v676
        %v700 = vmul.f32 %v696, %v699
        %701 = vrot.lane.b32.xlu0 %v454, 16
        %v702 = vpop.permute.xlu0 %701
        %v704 = vmul.f32 %v453, %v702
        %705 = vrot.lane.b32.xlu0 %v455, 20
        %v706 = vpop.permute.xlu0 %705
        %v708 = vmul.f32 %v453, %v706
        %710 = vrot.lane.b32.xlu0 %v708, 124
        %v711 = vpop.permute.xlu0 %710
        %v713 = vsub.f32 %v704, %v711
        %714 = vrot.lane.b32.xlu0 %v454, 20
        %v715 = vpop.permute.xlu0 %714
        %v717 = vmul.f32 %v453, %v715
        %718 = vrot.lane.b32.xlu0 %v455, 16
        %v719 = vpop.permute.xlu0 %718
        %v721 = vmul.f32 %v453, %v719
        %723 = vrot.lane.b32.xlu0 %v721, 4
        %v724 = vpop.permute.xlu0 %723
        %v726 = vadd.f32 %v717, %v724
        %728 = vrot.lane.b32.xlu0 %v713, 112
        %v729 = vpop.permute.xlu0 %728
        %732 = vrot.lane.b32.xlu0 %v726, 112
        %v733 = vpop.permute.xlu0 %732
        %v735 = vsel %vm478, %v729, %v733
        %v736 = vmul.f32 %v735, 0.35355338
        %v737 = vpack.c.bf16 %v736, %v736
        %738 = vrot.lane.b32.xlu0 %v454, 48
        %v739 = vpop.permute.xlu0 %738
        %v741 = vmul.f32 %v453, %v739
        %742 = vrot.lane.b32.xlu0 %v455, 52
        %v743 = vpop.permute.xlu0 %742
        %v745 = vmul.f32 %v453, %v743
        %747 = vrot.lane.b32.xlu0 %v745, 124
        %v748 = vpop.permute.xlu0 %747
        %v750 = vsub.f32 %v741, %v748
        %751 = vrot.lane.b32.xlu0 %v454, 52
        %v752 = vpop.permute.xlu0 %751
        %v754 = vmul.f32 %v453, %v752
        %755 = vrot.lane.b32.xlu0 %v455, 48
        %v756 = vpop.permute.xlu0 %755
        %v758 = vmul.f32 %v453, %v756
        %760 = vrot.lane.b32.xlu0 %v758, 4
        %v761 = vpop.permute.xlu0 %760
        %v763 = vadd.f32 %v754, %v761
        %765 = vrot.lane.b32.xlu0 %v750, 80
        %v766 = vpop.permute.xlu0 %765
        %769 = vrot.lane.b32.xlu0 %v763, 80
        %v770 = vpop.permute.xlu0 %769
        %v772 = vsel %vm478, %v766, %v770
        %v773 = vpack.c.bf16 %v772, %v772
        %v775 = vsel %vm519, %v737, 0
        %v778 = vsel %vm519, %v773, 0
        %780 = vmatpush.bf16.xpose.msra.mxu0 0
        %781 = vmatpush.bf16.xpose.msra.mxu0 0
        %782 = vmatpush.bf16.xpose.msra.mxu0 0
        %783 = vmatpush.bf16.xpose.msra.mxu0 0
        %784 = vmatpush.bf16.xpose.msra.mxu0 0
        %785 = vmatpush.bf16.xpose.msra.mxu0 0
        %786 = vmatpush.bf16.xpose.msra.mxu0 0
        %787 = vmatpush.bf16.xpose.msra.mxu0 %v778
        %788 = vmatmul.bf16.gmra.mxu0 %v775
        %v789 = vpop.f32.mrf.mxu0
        %v790 = vadd.f32 0.0, %v789
        %v791 = vpop.f32.mrf.mxu0
        %792 = vdwg.mxu0
        %v793 = vsel %vm519, %v790, -inf
        %794 = vmax.xlane.f32.xlu0 %v793
        %v795 = vpop.xlane.xlu0 %794
        %v796 = vsub.f32 %v790, %v795
        %v797 = vmul.f32 %v796, 1.442695
        %v798 = vpow.pop %v797
        %v799 = vsel %vm519, %v798, 0.0
        %800 = vadd.xlane.f32.xlu0 %v799
        %v801 = vpop.xlane.xlu0 %800
        %v802 = vpack.c.bf16 %v798, %v798
        %803 = vrot.lane.b32.xlu0 %v551, 48
        %v804 = vpop.permute.xlu0 %803
        %v806 = vsel %vm519, %v802, 0
        %v809 = vsel %vm557, %v804, 0
        %811 = vmatpush.bf16.msra.mxu0 0
        %812 = vmatpush.bf16.msra.mxu0 0
        %813 = vmatpush.bf16.msra.mxu0 0
        %814 = vmatpush.bf16.msra.mxu0 0
        %815 = vmatpush.bf16.msra.mxu0 0
        %816 = vmatpush.bf16.msra.mxu0 0
        %817 = vmatpush.bf16.msra.mxu0 0
        %818 = vmatpush.bf16.msra.mxu0 %v809
        %819 = vmatmul.bf16.gmra.mxu0 %v806
        %v820 = vpop.f32.mrf.mxu0
        %v821 = vadd.f32 0.0, %v820
        %v822 = vpop.f32.mrf.mxu0
        %823 = vdwg.mxu0
        %v824 = vrcp.pop %v801
        %v825 = vmul.f32 %v821, %v824
        %826 = vrot.lane.b32.xlu0 %v454, 24
        %v827 = vpop.permute.xlu0 %826
        %v829 = vmul.f32 %v453, %v827
        %830 = vrot.lane.b32.xlu0 %v455, 28
        %v831 = vpop.permute.xlu0 %830
        %v833 = vmul.f32 %v453, %v831
        %835 = vrot.lane.b32.xlu0 %v833, 124
        %v836 = vpop.permute.xlu0 %835
        %v838 = vsub.f32 %v829, %v836
        %839 = vrot.lane.b32.xlu0 %v454, 28
        %v840 = vpop.permute.xlu0 %839
        %v842 = vmul.f32 %v453, %v840
        %843 = vrot.lane.b32.xlu0 %v455, 24
        %v844 = vpop.permute.xlu0 %843
        %v846 = vmul.f32 %v453, %v844
        %848 = vrot.lane.b32.xlu0 %v846, 4
        %v849 = vpop.permute.xlu0 %848
        %v851 = vadd.f32 %v842, %v849
        %853 = vrot.lane.b32.xlu0 %v838, 104
        %v854 = vpop.permute.xlu0 %853
        %857 = vrot.lane.b32.xlu0 %v851, 104
        %v858 = vpop.permute.xlu0 %857
        %v860 = vsel %vm478, %v854, %v858
        %v861 = vmul.f32 %v860, 0.35355338
        %v862 = vpack.c.bf16 %v861, %v861
        %863 = vrot.lane.b32.xlu0 %v454, 56
        %v864 = vpop.permute.xlu0 %863
        %v866 = vmul.f32 %v453, %v864
        %867 = vrot.lane.b32.xlu0 %v455, 60
        %v868 = vpop.permute.xlu0 %867
        %v870 = vmul.f32 %v453, %v868
        %872 = vrot.lane.b32.xlu0 %v870, 124
        %v873 = vpop.permute.xlu0 %872
        %v875 = vsub.f32 %v866, %v873
        %876 = vrot.lane.b32.xlu0 %v454, 60
        %v877 = vpop.permute.xlu0 %876
        %v879 = vmul.f32 %v453, %v877
        %880 = vrot.lane.b32.xlu0 %v455, 56
        %v881 = vpop.permute.xlu0 %880
        %v883 = vmul.f32 %v453, %v881
        %885 = vrot.lane.b32.xlu0 %v883, 4
        %v886 = vpop.permute.xlu0 %885
        %v888 = vadd.f32 %v879, %v886
        %890 = vrot.lane.b32.xlu0 %v875, 72
        %v891 = vpop.permute.xlu0 %890
        %894 = vrot.lane.b32.xlu0 %v888, 72
        %v895 = vpop.permute.xlu0 %894
        %v897 = vsel %vm478, %v891, %v895
        %v898 = vpack.c.bf16 %v897, %v897
        %v900 = vsel %vm519, %v862, 0
        %v903 = vsel %vm519, %v898, 0
        %905 = vmatpush.bf16.xpose.msra.mxu0 0
        %906 = vmatpush.bf16.xpose.msra.mxu0 0
        %907 = vmatpush.bf16.xpose.msra.mxu0 0
        %908 = vmatpush.bf16.xpose.msra.mxu0 0
        %909 = vmatpush.bf16.xpose.msra.mxu0 0
        %910 = vmatpush.bf16.xpose.msra.mxu0 0
        %911 = vmatpush.bf16.xpose.msra.mxu0 0
        %912 = vmatpush.bf16.xpose.msra.mxu0 %v903
        %913 = vmatmul.bf16.gmra.mxu0 %v900
        %v914 = vpop.f32.mrf.mxu0
        %v915 = vadd.f32 0.0, %v914
        %v916 = vpop.f32.mrf.mxu0
        %917 = vdwg.mxu0
        %v918 = vsel %vm519, %v915, -inf
        %919 = vmax.xlane.f32.xlu0 %v918
        %v920 = vpop.xlane.xlu0 %919
        %v921 = vsub.f32 %v915, %v920
        %v922 = vmul.f32 %v921, 1.442695
        %v923 = vpow.pop %v922
        %v924 = vsel %vm519, %v923, 0.0
        %925 = vadd.xlane.f32.xlu0 %v924
        %v926 = vpop.xlane.xlu0 %925
        %v927 = vpack.c.bf16 %v923, %v923
        %928 = vrot.lane.b32.xlu0 %v551, 40
        %v929 = vpop.permute.xlu0 %928
        %v931 = vsel %vm519, %v927, 0
        %v934 = vsel %vm557, %v929, 0
        %936 = vmatpush.bf16.msra.mxu0 0
        %937 = vmatpush.bf16.msra.mxu0 0
        %938 = vmatpush.bf16.msra.mxu0 0
        %939 = vmatpush.bf16.msra.mxu0 0
        %940 = vmatpush.bf16.msra.mxu0 0
        %941 = vmatpush.bf16.msra.mxu0 0
        %942 = vmatpush.bf16.msra.mxu0 0
        %943 = vmatpush.bf16.msra.mxu0 %v934
        %944 = vmatmul.bf16.gmra.mxu0 %v931
        %v945 = vpop.f32.mrf.mxu0
        %v946 = vadd.f32 0.0, %v945
        %v947 = vpop.f32.mrf.mxu0
        %948 = vdwg.mxu0
        %v949 = vrcp.pop %v926
        %v950 = vmul.f32 %v946, %v949
        %952 = vrot.lane.b32.xlu0 %v700, 8
        %v953 = vpop.permute.xlu0 %952
        %956 = vrot.lane.b32.xlu0 %v825, 16
        %v957 = vpop.permute.xlu0 %956
        %960 = vrot.lane.b32.xlu0 %v950, 24
        %v961 = vpop.permute.xlu0 %960
        %v963 = vsel %vm519, %v575, %v953
        %vm964 = vcmask 130048
        %v965 = vsel %vm964, %v963, %v957
        %vm966 = vcmask 195584
        %v967 = vsel %vm966, %v965, %v961
        %v968 = vpack.c.bf16 %v967, %v967
        %v969 = vld [vmem:[#allocation8] sm:$0xf]
        %v970 = vld [vmem:[#allocation8 + $0x4] sm:$0xf]
        %v971 = vld [vmem:[#allocation8 + $0x8] sm:$0xf]
        %v972 = vld [vmem:[#allocation8 + $0xc] sm:$0xf]
        %v973 = vld [vmem:[%s8] sm:$0x1]
        %v975 = vperm.slane %v973, 0
        %v981 = vunpack.c.l.b16 %v969
        %v982 = vunpack.c.l.b16 %v970
        %v983 = vunpack.c.l.b16 %v971
        %v984 = vunpack.c.l.b16 %v972
        %v985 = vpack.c.b16 %v982, %v981
        %v986 = vpack.c.b16 %v984, %v983
        %v990 = vsel %vm414, %v968, 0
        %992 = vmatpush.bf16.msra.mxu0 0
        %993 = vmatpush.bf16.msra.mxu0 0
        %994 = vmatpush.bf16.msra.mxu0 0
        %995 = vmatpush.bf16.msra.mxu0 0
        %996 = vmatpush.bf16.msra.mxu0 0
        %997 = vmatpush.bf16.msra.mxu0 0
        %998 = vmatpush.bf16.msra.mxu0 %v986
        %999 = vmatpush.bf16.msra.mxu0 %v985
        %1000 = vmatmul.bf16.gmra.mxu0 %v990
        %v1001 = vpop.f32.mrf.mxu0
        %v1002 = vadd.f32 %v975, %v1001
        %v1003 = vpop.f32.mrf.mxu0
        %1004 = vdwg.mxu0
        %1005 = vst.msk [vmem:[%s386] sm:$0xff] %vm414, %v1002
        %s1006 = sand.u32 %s228, 1
        %s1007 = scalar_lea.sflag [#allocation4], %s1006
        %s1008 = sand.u32 %s228, 1
        %s1009 = smul.addr %s1008, 8
        %s1010 = scalar_lea.vmem [#allocation10], %s1009
        // Predicated region
        $region73: #{tpu_custom_call.1} parent=55 // pred_check
          %p1011 = pneg %p238
        $region74: #{tpu_custom_call.1} parent=55 // pred_check_branch
          %1013 = sbr.rel (%p1011) target = $region76
        $region75: #{tpu_custom_call.1} parent=55 // pred_region
          %1015 = vsyncadd %s1007, 0
          %s1016 = smul.addr %s26, 8
          %s1017 = scalar_lea.hbm %s9, %s1016
          %s1019 = sshll.u32 %s1010, 4
          %s1020 = int_to_ptr.vmem [resolvable:$true] %s1019
          %s1021 = sshll.u32 %s1017, 4
          %s1022 = int_to_ptr.hbm [resolvable:$true] %s1021
          %1024 = dma.vmem_to_hbm [thread:$0]  %s1020, 128, %s1022, %s1007
        $region76: #{tpu_custom_call.1} parent=55 // pred_fallthru
          _
      $region56: #{tpu_custom_call.1} parent=5 // pred_fallthru
        _
      %p1025 = scmp.le.s32.totalorder 2, %s21
      // Predicated region
      $region77: #{tpu_custom_call.1} parent=5 // pred_check
        %p1026 = pneg %p1025
      $region78: #{tpu_custom_call.1} parent=5 // pred_check_branch
        %1028 = sbr.rel (%p1026) target = $region80
      $region79: #{tpu_custom_call.1} parent=5 // pred_region
        %s1029 = ssub.s32 %s21, 2
        // Predicated region
        $region81: #{tpu_custom_call.1} parent=79 // pred_check
          %p1030 = pneg %p244
        $region82: #{tpu_custom_call.1} parent=79 // pred_check_branch
          %1032 = sbr.rel (%p1030) target = $region84
        $region83: #{tpu_custom_call.1} parent=79 // pred_region
          %s1033 = sand.u32 %s229, 1
          %s1034 = scalar_lea.sflag [#allocation4], %s1033
          %s1035 = sand.u32 %s229, 1
          %s1036 = smul.addr %s1035, 8
          %s1037 = scalar_lea.vmem [#allocation10], %s1036
          %1039 = dma.done %s1034, 128
        $region84: #{tpu_custom_call.1} parent=79 // pred_fallthru
          _
      $region80: #{tpu_custom_call.1} parent=5 // pred_fallthru
        _
    $region6: #{tpu_custom_call.1} parent=1 // loop_footer
      %s25 = sadd.s32 1, %s21
    $region7: #{tpu_custom_call.1} parent=1 // loop_footer_branch
      %20 = sbr.rel target = $region3
    $region8: #{tpu_custom_call.1} parent=1 // loop_exit
      _
    %1040 = vsyncpa [#allocation3], 1
    %s1041 = scalar_lea.sflag [#allocation3], 1
    %1042 = vsyncpa %s1041, 1
    %1043 = vsyncpa [#allocation6], 1
    %1044 = vsyncpa [#allocation9], 1
    %1045 = vsyncpa [#allocation4], 1
    %s1046 = scalar_lea.sflag [#allocation4], 1
    %1047 = vsyncpa %s1046, 1

</llo_original>
